<compile_context>
chip_gen: v6e
topology: v6e:2x2x1
jax: 0.10.0
libtpu: 0.0.40
codegen_flags: <defaults>
</compile_context>

<pallas_src>
import jax
import jax.numpy as jnp
from jax import lax
from jax.experimental import pallas as pl
from jax.experimental.pallas import tpu as pltpu

EPS = 1e-5   # PyTorch BatchNorm1d default eps

D_IN = 64    # spatial_encoder_dims[-1] + hand_encoder_dims[-1] = 32 + 32
H1 = 64      # gq_head_dims[0]
H2 = 32      # gq_head_dims[1]


def _round_up(n, m):
    return ((n + m - 1) // m) * m


def _vmem_budget_bytes():
    """~75% of physical VMEM (v5e/v6e: 128 MiB -> 96 MiB, v7x: 64 MiB -> 48 MiB)."""
    try:
        cap = int(pltpu.get_tpu_info().vmem_capacity_bytes)
    except Exception:
        cap = 64 * 1024 * 1024          # conservative (v7x-sized) fallback
    return (cap * 3) // 4


def _make_kernel(batch, tb, use_cache, mxu_dtype):
    """3-pass gq_head kernel for a fixed true batch size and batch-tile width."""
    inv_b = 1.0 / float(batch)
    ragged = (batch % tb) != 0          # only then is any masking compiled in

    def kernel(x_ref, w1_ref, w2_ref, w3_ref,
               g1_ref, be1_ref, g2_ref, be2_ref, b3_ref,
               out_ref, s1, sq1, s2, sq2, *maybe_cache):
        h2c = maybe_cache[0] if use_cache else None
        p = pl.program_id(0)   # 0: BN1 stats | 1: BN2 stats (+ h2 cache) | 2: final
        t = pl.program_id(1)   # batch tile

        @pl.when((p == 0) & (t == 0))
        def _init():
            s1[...] = jnp.zeros_like(s1)
            sq1[...] = jnp.zeros_like(sq1)
            s2[...] = jnp.zeros_like(s2)
            sq2[...] = jnp.zeros_like(sq2)

        if ragged:
            # Lane mask for the (only) partial tile; padded rows of the x block
            # contain unspecified data and must not pollute the BN statistics.
            col = t * tb + lax.broadcasted_iota(jnp.int32, (1, tb), 1)
            valid = col < batch
        else:
            valid = None

        def layer1():
            # h1 = W1 @ x^T : contract the feature axis of both operands.  The
            # (tb, 64) tile transpose happens on-chip (MXU/XLU), replacing the
            # old host-side HBM transpose copy.  b1 is dropped: it cancels in
            # the BN mean subtraction.
            xt = x_ref[...].astype(mxu_dtype)                          # (tb, 64)
            return lax.dot_general(w1_ref[...], xt,
                                   (((1,), (1,)), ((), ())),
                                   preferred_element_type=jnp.float32)  # (64, tb)

        def bn1_scale_shift():
            mean1 = s1[...] * inv_b
            var1 = jnp.maximum(sq1[...] * inv_b - mean1 * mean1, 0.0)
            scale1 = g1_ref[...] * lax.rsqrt(var1 + EPS)
            return scale1, be1_ref[...] - mean1 * scale1

        def layer2():
            scale1, shift1 = bn1_scale_shift()
            a1 = jnp.maximum(layer1() * scale1 + shift1, 0.0)          # (64, tb)
            return jnp.dot(w2_ref[...], a1.astype(mxu_dtype),
                           preferred_element_type=jnp.float32)         # (32, tb)

        @pl.when(p == 0)
        def _bn1_stats():
            h1 = layer1()
            if ragged:
                h1 = jnp.where(valid, h1, 0.0)
            s1[...] += jnp.sum(h1, axis=-1, keepdims=True)
            sq1[...] += jnp.sum(h1 * h1, axis=-1, keepdims=True)

        @pl.when(p == 1)
        def _bn2_stats():
            h2 = layer2()
            if ragged:
                h2 = jnp.where(valid, h2, 0.0)   # mask the (32,tb) h2, not (64,tb) a1
            s2[...] += jnp.sum(h2, axis=-1, keepdims=True)
            sq2[...] += jnp.sum(h2 * h2, axis=-1, keepdims=True)
            if use_cache:
                start = pl.multiple_of(t * tb, tb)
                h2c[:, pl.ds(start, tb)] = h2    # f32 cache: pass 2 skips x & W1/W2

        @pl.when(p == 2)
        def _final():
            if use_cache:
                start = pl.multiple_of(t * tb, tb)
                h2 = h2c[:, pl.ds(start, tb)]
            else:
                h2 = layer2()                    # recompute fallback (huge batches)
            mean2 = s2[...] * inv_b
            var2 = jnp.maximum(sq2[...] * inv_b - mean2 * mean2, 0.0)
            scale2 = g2_ref[...] * lax.rsqrt(var2 + EPS)
            shift2 = be2_ref[...] - mean2 * scale2
            a2 = jnp.maximum(h2 * scale2 + shift2, 0.0)                # (32, tb)
            # Final 32->1 layer as (1,32)x(32,tb): lane-dense (1, tb) output row.
            y = jnp.dot(w3_ref[...], a2.astype(mxu_dtype),
                        preferred_element_type=jnp.float32) + b3_ref[...]
            out_ref[...] = y

    return kernel


def gq_head_forward(x, params, *, mxu_dtype=jnp.bfloat16,
                    tile_cols=8192, resident_cols=None, use_h2_cache=None):
    """Fused gq_head MLP (training-mode BatchNorm) in one Pallas kernel.

    Returns shape (B,), matching torch's .view(-1).
    """
    B, F = x.shape
    assert F == D_IN, f"expected {D_IN} input features, got {F}"

    budget = _vmem_budget_bytes()
    data_budget = max(budget - (4 << 20), 8 << 20)   # reserve for weights/accs/out

    x_bytes = jnp.dtype(x.dtype).itemsize
    # Per-column VMEM if the whole batch is one resident tile:
    # x block (double-buffered by the pipeline) + f32 h2 cache.
    per_col = D_IN * x_bytes * 2 + H2 * 4
    if resident_cols is None:
        resident_cols = max(128, (data_budget // per_col) // 128 * 128)

    b128 = _round_up(B, 128)
    if b128 <= resident_cols:
        tb, nt = b128, 1                 # whole batch resident: x read from HBM once
    else:
        tb = _round_up(min(tile_cols, b128), 128)
        nt = pl.cdiv(B, tb)

    if use_h2_cache is None:
        need = H2 * 4 * nt * tb + D_IN * x_bytes * tb * 2
        use_h2_cache = need <= data_budget

    # Pre-cast weights to the MXU dtype once (drops per-step VPU casts).
    w1 = params["w1t"].astype(mxu_dtype)
    w2 = params["w2t"].astype(mxu_dtype)
    w3 = params["w3t"].astype(mxu_dtype)
    g1, be1 = params["g1"], params["be1"]
    g2, be2 = params["g2"], params["be2"]
    b3 = params["b3"]

    const = lambda p, t: (0, 0)          # params stay VMEM-resident across all steps
    if nt == 1:
        x_map = lambda p, t: (0, 0)      # single tile -> one DMA, resident for 3 passes
        out_map = lambda p, t: (0, 0)
    else:
        if use_h2_cache:
            # Pass 2 never reads x: pin its block index so no DMAs are issued then.
            x_map = lambda p, t: (jnp.where(p == 2, 0, t), 0)
        else:
            x_map = lambda p, t: (t, 0)
        # Keep the output block pinned until pass 2 -> no garbage intermediate
        # writebacks to HBM during the stats passes.
        out_map = lambda p, t: (0, jnp.where(p == 2, t, 0))

    scratch = [
        pltpu.VMEM((H1, 1), jnp.float32),   # sum  h1
        pltpu.VMEM((H1, 1), jnp.float32),   # sum  h1^2
        pltpu.VMEM((H2, 1), jnp.float32),   # sum  h2
        pltpu.VMEM((H2, 1), jnp.float32),   # sum  h2^2
    ]
    if use_h2_cache:
        scratch.append(pltpu.VMEM((H2, nt * tb), jnp.float32))   # h2 cache

    kernel = _make_kernel(B, tb, use_h2_cache, mxu_dtype)

    out = pl.pallas_call(
        kernel,
        out_shape=jax.ShapeDtypeStruct((1, B), jnp.float32),
        grid_spec=pltpu.PrefetchScalarGridSpec(
            num_scalar_prefetch=0,
            grid=(3, nt),                                   # (pass, batch tile)
            in_specs=[
                pl.BlockSpec((tb, D_IN), x_map),            # x tile, native layout
                pl.BlockSpec((H1, D_IN), const),            # W1 (out, in)
                pl.BlockSpec((H2, H1), const),              # W2
                pl.BlockSpec((1, H2), const),               # W3
                pl.BlockSpec((H1, 1), const),               # gamma1
                pl.BlockSpec((H1, 1), const),               # beta1
                pl.BlockSpec((H2, 1), const),               # gamma2
                pl.BlockSpec((H2, 1), const),               # beta2
                pl.BlockSpec((1, 1), const),                # b3
            ],
            out_specs=pl.BlockSpec((1, tb), out_map),
            scratch_shapes=scratch,
        ),
        compiler_params=pltpu.CompilerParams(
            # BN stats accumulate across batch tiles and pass order matters,
            # so neither grid axis can be megacore-parallel.
            dimension_semantics=("arbitrary", "arbitrary"),
            vmem_limit_bytes=int(budget),
        ),
    )(x, w1, w2, w3, g1, be1, g2, be2, b3)

    return out[0]   # (B,), matches torch .view(-1)


def init_params(key):
    """Deterministic synthetic parameters with the module's shapes.

    Weights stored torch-style (out_features, in_features); gammas/betas as
    (features, 1) columns for the (features, batch) kernel layout.  b1/b2 are
    only used by the reference (training-mode BN cancels them exactly).
    """
    ks = jax.random.split(key, 10)
    return {
        "w1t": jax.random.normal(ks[0], (H1, D_IN), jnp.float32) * 0.1,
        "b1":  jax.random.normal(ks[1], (1, H1), jnp.float32) * 0.1,   # ref only
        "g1":  jax.random.uniform(ks[2], (H1, 1), jnp.float32, 0.5, 1.5),
        "be1": jax.random.normal(ks[3], (H1, 1), jnp.float32) * 0.1,
        "w2t": jax.random.normal(ks[4], (H2, H1), jnp.float32) * 0.1,
        "b2":  jax.random.normal(ks[5], (1, H2), jnp.float32) * 0.1,   # ref only
        "g2":  jax.random.uniform(ks[6], (H2, 1), jnp.float32, 0.5, 1.5),
        "be2": jax.random.normal(ks[7], (H2, 1), jnp.float32) * 0.1,
        "w3t": jax.random.normal(ks[8], (1, H2), jnp.float32) * 0.1,
        "b3":  jax.random.normal(ks[9], (1, 1), jnp.float32) * 0.1,
    }


def gq_head_reference(x, p):
    """Pure-JAX, PyTorch-faithful reference (biases included, two-pass BN)."""
    hp = jax.lax.Precision.HIGHEST

    def bn(h, g, b):
        m = jnp.mean(h, axis=0, keepdims=True)
        v = jnp.mean((h - m) ** 2, axis=0, keepdims=True)
        return (h - m) / jnp.sqrt(v + EPS) * g + b

    h = jnp.dot(x, p["w1t"].T, precision=hp) + p["b1"]
    h = jnp.maximum(bn(h, p["g1"].T, p["be1"].T), 0.0)
    h = jnp.dot(h, p["w2t"].T, precision=hp) + p["b2"]
    h = jnp.maximum(bn(h, p["g2"].T, p["be2"].T), 0.0)
    y = jnp.dot(h, p["w3t"].T, precision=hp) + p["b3"]
    return y.reshape(-1)


if __name__ == "__main__":
    key = jax.random.PRNGKey(0)
    k_x, k_x2, k_p = jax.random.split(key, 3)
    params = init_params(k_p)

    # Primary small shape: batch=64, features=64 (= spatial 32 + hand 32).
    B = 64
    x = jax.random.normal(k_x, (B, D_IN), jnp.float32)
    ref = gq_head_reference(x, params)

    # f32 MXU operands: single resident tile, 3 grid steps, x read from HBM once.
    # (Tolerance is kept loose enough to cover any f32-matmul lowering mode.)
    out_f32 = jax.block_until_ready(gq_head_forward(x, params, mxu_dtype=jnp.float32))
    assert out_f32.shape == (B,)
    assert jnp.allclose(out_f32, ref, atol=2e-2, rtol=2e-2), (out_f32, ref)

    # Default fast path: bf16 MXU operands, f32 accumulation / f32 BN statistics.
    out_bf16 = jax.block_until_ready(gq_head_forward(x, params))
    assert out_bf16.shape == (B,)
    assert jnp.allclose(out_bf16, ref, atol=5e-2, rtol=5e-2), (out_bf16, ref)

    # Exercise the multi-tile paths at a small shape (forced tiny tiles):
    # batch tiling + persistent h2 cache, ragged last tile.
    B2 = 300
    x2 = jax.random.normal(k_x2, (B2, D_IN), jnp.float32)
    ref2 = gq_head_reference(x2, params)
    out_tiled = jax.block_until_ready(
        gq_head_forward(x2, params, resident_cols=0, tile_cols=128))
    assert out_tiled.shape == (B2,)
    assert jnp.allclose(out_tiled, ref2, atol=5e-2, rtol=5e-2), (out_tiled, ref2)

    # ... and the no-cache recompute fallback used for batches beyond the budget.
    out_nocache = jax.block_until_ready(
        gq_head_forward(x2, params, resident_cols=0, tile_cols=128,
                        use_h2_cache=False))
    assert jnp.allclose(out_nocache, ref2, atol=5e-2, rtol=5e-2), (out_nocache, ref2)

    print("KERNEL_OK")
</pallas_src>

<mosaic_0001>
module attributes {stable_mosaic.version = 11 : i64} {
  func.func @kernel(%arg0: i32, %arg1: i32, %arg2: memref<128x64xf32, #tpu.memory_space<vmem>>, %arg3: memref<64x64xf32, #tpu.memory_space<vmem>>, %arg4: memref<32x64xf32, #tpu.memory_space<vmem>>, %arg5: memref<1x32xf32, #tpu.memory_space<vmem>>, %arg6: memref<64x1xf32, #tpu.memory_space<vmem>>, %arg7: memref<64x1xf32, #tpu.memory_space<vmem>>, %arg8: memref<32x1xf32, #tpu.memory_space<vmem>>, %arg9: memref<32x1xf32, #tpu.memory_space<vmem>>, %arg10: memref<1x1xf32, #tpu.memory_space<vmem>>, %arg11: memref<1x128xf32, #tpu.memory_space<vmem>>, %arg12: memref<64x1xf32, #tpu.memory_space<vmem>>, %arg13: memref<64x1xf32, #tpu.memory_space<vmem>>, %arg14: memref<32x1xf32, #tpu.memory_space<vmem>>, %arg15: memref<32x1xf32, #tpu.memory_space<vmem>>, %arg16: memref<32x128xf32, #tpu.memory_space<vmem>>) attributes {dimension_semantics = [#tpu.dimension_semantics<arbitrary>, #tpu.dimension_semantics<arbitrary>], iteration_bounds = array<i64: 3, 1>, scalar_prefetch = 0 : i64, scratch_operands = 5 : i64, tpu.core_type = #tpu.core_type<tc>, window_params = [{transform_indices = @transform_0, window_bounds = array<i64: 128, 64>}, {pipeline_mode = #tpu.pipeline_mode<synchronous>, transform_indices = @transform_1, window_bounds = array<i64: 64, 64>}, {pipeline_mode = #tpu.pipeline_mode<synchronous>, transform_indices = @transform_2, window_bounds = array<i64: 32, 64>}, {pipeline_mode = #tpu.pipeline_mode<synchronous>, transform_indices = @transform_3, window_bounds = array<i64: 1, 32>}, {pipeline_mode = #tpu.pipeline_mode<synchronous>, transform_indices = @transform_4, window_bounds = array<i64: 64, 1>}, {pipeline_mode = #tpu.pipeline_mode<synchronous>, transform_indices = @transform_5, window_bounds = array<i64: 64, 1>}, {pipeline_mode = #tpu.pipeline_mode<synchronous>, transform_indices = @transform_6, window_bounds = array<i64: 32, 1>}, {pipeline_mode = #tpu.pipeline_mode<synchronous>, transform_indices = @transform_7, window_bounds = array<i64: 32, 1>}, {pipeline_mode = #tpu.pipeline_mode<synchronous>, transform_indices = @transform_8, window_bounds = array<i64: 1, 1>}, {transform_indices = @transform_9, window_bounds = array<i64: 1, 128>}]} {
    %c0_i32 = arith.constant 0 : i32
    %0 = arith.cmpi eq, %arg0, %c0_i32 : i32
    %c0_i32_0 = arith.constant 0 : i32
    %1 = arith.cmpi eq, %arg1, %c0_i32_0 : i32
    %2 = arith.andi %0, %1 : i1
    %3 = arith.extui %2 : i1 to i32
    %c0_i32_1 = arith.constant 0 : i32
    %4 = arith.cmpi ne, %3, %c0_i32_1 : i32
    scf.if %4 {
      %cst = arith.constant 0.000000e+00 : f32
      %20 = vector.broadcast %cst : f32 to vector<64x1xf32>
      %c0 = arith.constant 0 : index
      %c0_6 = arith.constant 0 : index
      %21 = vector.load %arg12[%c0, %c0_6] : memref<64x1xf32, #tpu.memory_space<vmem>>, vector<64x1xf32>
      tpu.vector_store %arg12[%c0, %c0_6], %20 {strides = array<i32>} : memref<64x1xf32, #tpu.memory_space<vmem>>, vector<64x1xf32>,
      %cst_7 = arith.constant 0.000000e+00 : f32
      %22 = vector.broadcast %cst_7 : f32 to vector<64x1xf32>
      %c0_8 = arith.constant 0 : index
      %c0_9 = arith.constant 0 : index
      %23 = vector.load %arg13[%c0_8, %c0_9] : memref<64x1xf32, #tpu.memory_space<vmem>>, vector<64x1xf32>
      tpu.vector_store %arg13[%c0_8, %c0_9], %22 {strides = array<i32>} : memref<64x1xf32, #tpu.memory_space<vmem>>, vector<64x1xf32>,
      %cst_10 = arith.constant 0.000000e+00 : f32
      %24 = vector.broadcast %cst_10 : f32 to vector<32x1xf32>
      %c0_11 = arith.constant 0 : index
      %c0_12 = arith.constant 0 : index
      %25 = vector.load %arg14[%c0_11, %c0_12] : memref<32x1xf32, #tpu.memory_space<vmem>>, vector<32x1xf32>
      tpu.vector_store %arg14[%c0_11, %c0_12], %24 {strides = array<i32>} : memref<32x1xf32, #tpu.memory_space<vmem>>, vector<32x1xf32>,
      %cst_13 = arith.constant 0.000000e+00 : f32
      %26 = vector.broadcast %cst_13 : f32 to vector<32x1xf32>
      %c0_14 = arith.constant 0 : index
      %c0_15 = arith.constant 0 : index
      %27 = vector.load %arg15[%c0_14, %c0_15] : memref<32x1xf32, #tpu.memory_space<vmem>>, vector<32x1xf32>
      tpu.vector_store %arg15[%c0_14, %c0_15], %26 {strides = array<i32>} : memref<32x1xf32, #tpu.memory_space<vmem>>, vector<32x1xf32>,
    } else {
    }
    %c128_i32 = arith.constant 128 : i32
    %5 = arith.muli %arg1, %c128_i32 : i32
    %6 = tpu.iota {dimensions = array<i32: 1>} : vector<1x128xi32>
    %7 = vector.broadcast %5 : i32 to vector<1x128xi32>
    %8 = arith.addi %7, %6 : vector<1x128xi32>
    %c64_i32 = arith.constant 64 : i32
    %9 = vector.broadcast %c64_i32 : i32 to vector<1x128xi32>
    %10 = arith.cmpi slt, %8, %9 : vector<1x128xi32>
    %c0_i32_2 = arith.constant 0 : i32
    %11 = arith.cmpi eq, %arg0, %c0_i32_2 : i32
    %12 = arith.extui %11 : i1 to i32
    %c0_i32_3 = arith.constant 0 : i32
    %13 = arith.cmpi ne, %12, %c0_i32_3 : i32
    scf.if %13 {
      %c0 = arith.constant 0 : index
      %c0_6 = arith.constant 0 : index
      %20 = vector.load %arg2[%c0, %c0_6] : memref<128x64xf32, #tpu.memory_space<vmem>>, vector<128x64xf32>
      %c0_7 = arith.constant 0 : index
      %c0_8 = arith.constant 0 : index
      %21 = vector.load %arg3[%c0_7, %c0_8] : memref<64x64xf32, #tpu.memory_space<vmem>>, vector<64x64xf32>
      %cst = arith.constant dense<0.000000e+00> : vector<64x128xf32>
      %22 = tpu.matmul %21, %20, %cst {dimension_numbers = #tpu.dot_dimension_numbers<[1], [1], [0], [0], [0, 0, 1, 0], [], []>} : vector<64x64xf32>, vector<128x64xf32>, vector<64x128xf32> -> vector<64x128xf32>
      %cst_9 = arith.constant 0.000000e+00 : f32
      %23 = vector.shape_cast %10 : vector<1x128xi1> to vector<1x128xi1>
      %24 = vector.broadcast %23 : vector<1x128xi1> to vector<64x128xi1>
      %25 = vector.broadcast %cst_9 : f32 to vector<64x128xf32>
      %26 = arith.select %24, %22, %25 : vector<64x128xi1>, vector<64x128xf32>
      %c0_10 = arith.constant 0 : index
      %c0_11 = arith.constant 0 : index
      %27 = vector.load %arg12[%c0_10, %c0_11] : memref<64x1xf32, #tpu.memory_space<vmem>>, vector<64x1xf32>
      %cst_12 = arith.constant dense<0.000000e+00> : vector<64xf32>
      %28 = vector.multi_reduction <add>, %26, %cst_12 [1] : vector<64x128xf32> to vector<64xf32>
      %29 = vector.shape_cast %28 : vector<64xf32> to vector<64x1xf32>
      %30 = arith.addf %27, %29 : vector<64x1xf32>
      %c0_13 = arith.constant 0 : index
      %c0_14 = arith.constant 0 : index
      %31 = vector.load %arg12[%c0_13, %c0_14] : memref<64x1xf32, #tpu.memory_space<vmem>>, vector<64x1xf32>
      tpu.vector_store %arg12[%c0_13, %c0_14], %30 {strides = array<i32>} : memref<64x1xf32, #tpu.memory_space<vmem>>, vector<64x1xf32>,
      %c0_15 = arith.constant 0 : index
      %c0_16 = arith.constant 0 : index
      %32 = vector.load %arg13[%c0_15, %c0_16] : memref<64x1xf32, #tpu.memory_space<vmem>>, vector<64x1xf32>
      %33 = arith.mulf %26, %26 : vector<64x128xf32>
      %cst_17 = arith.constant dense<0.000000e+00> : vector<64xf32>
      %34 = vector.multi_reduction <add>, %33, %cst_17 [1] : vector<64x128xf32> to vector<64xf32>
      %35 = vector.shape_cast %34 : vector<64xf32> to vector<64x1xf32>
      %36 = arith.addf %32, %35 : vector<64x1xf32>
      %c0_18 = arith.constant 0 : index
      %c0_19 = arith.constant 0 : index
      %37 = vector.load %arg13[%c0_18, %c0_19] : memref<64x1xf32, #tpu.memory_space<vmem>>, vector<64x1xf32>
      tpu.vector_store %arg13[%c0_18, %c0_19], %36 {strides = array<i32>} : memref<64x1xf32, #tpu.memory_space<vmem>>, vector<64x1xf32>,
    } else {
    }
    %c1_i32 = arith.constant 1 : i32
    %14 = arith.cmpi eq, %arg0, %c1_i32 : i32
    %15 = arith.extui %14 : i1 to i32
    %c0_i32_4 = arith.constant 0 : i32
    %16 = arith.cmpi ne, %15, %c0_i32_4 : i32
    scf.if %16 {
      %c0 = arith.constant 0 : index
      %c0_6 = arith.constant 0 : index
      %20 = vector.load %arg12[%c0, %c0_6] : memref<64x1xf32, #tpu.memory_space<vmem>>, vector<64x1xf32>
      %cst = arith.constant 1.562500e-02 : f32
      %21 = vector.broadcast %cst : f32 to vector<64x1xf32>
      %22 = arith.mulf %20, %21 : vector<64x1xf32>
      %c0_7 = arith.constant 0 : index
      %c0_8 = arith.constant 0 : index
      %23 = vector.load %arg13[%c0_7, %c0_8] : memref<64x1xf32, #tpu.memory_space<vmem>>, vector<64x1xf32>
      %cst_9 = arith.constant 1.562500e-02 : f32
      %24 = vector.broadcast %cst_9 : f32 to vector<64x1xf32>
      %25 = arith.mulf %23, %24 : vector<64x1xf32>
      %26 = arith.mulf %22, %22 : vector<64x1xf32>
      %27 = arith.subf %25, %26 : vector<64x1xf32>
      %cst_10 = arith.constant 0.000000e+00 : f32
      %28 = vector.broadcast %cst_10 : f32 to vector<64x1xf32>
      %29 = arith.maximumf %27, %28 : vector<64x1xf32>
      %c0_11 = arith.constant 0 : index
      %c0_12 = arith.constant 0 : index
      %30 = vector.load %arg6[%c0_11, %c0_12] : memref<64x1xf32, #tpu.memory_space<vmem>>, vector<64x1xf32>
      %cst_13 = arith.constant 9.99999974E-6 : f32
      %31 = vector.broadcast %cst_13 : f32 to vector<64x1xf32>
      %32 = arith.addf %29, %31 : vector<64x1xf32>
      %33 = math.rsqrt %32 : vector<64x1xf32>
      %34 = arith.mulf %30, %33 : vector<64x1xf32>
      %c0_14 = arith.constant 0 : index
      %c0_15 = arith.constant 0 : index
      %35 = vector.load %arg7[%c0_14, %c0_15] : memref<64x1xf32, #tpu.memory_space<vmem>>, vector<64x1xf32>
      %36 = arith.mulf %22, %34 : vector<64x1xf32>
      %37 = arith.subf %35, %36 : vector<64x1xf32>
      %c0_16 = arith.constant 0 : index
      %c0_17 = arith.constant 0 : index
      %38 = vector.load %arg2[%c0_16, %c0_17] : memref<128x64xf32, #tpu.memory_space<vmem>>, vector<128x64xf32>
      %c0_18 = arith.constant 0 : index
      %c0_19 = arith.constant 0 : index
      %39 = vector.load %arg3[%c0_18, %c0_19] : memref<64x64xf32, #tpu.memory_space<vmem>>, vector<64x64xf32>
      %cst_20 = arith.constant dense<0.000000e+00> : vector<64x128xf32>
      %40 = tpu.matmul %39, %38, %cst_20 {dimension_numbers = #tpu.dot_dimension_numbers<[1], [1], [0], [0], [0, 0, 1, 0], [], []>} : vector<64x64xf32>, vector<128x64xf32>, vector<64x128xf32> -> vector<64x128xf32>
      %41 = vector.broadcast %34 : vector<64x1xf32> to vector<64x128xf32>
      %42 = arith.mulf %40, %41 : vector<64x128xf32>
      %43 = vector.broadcast %37 : vector<64x1xf32> to vector<64x128xf32>
      %44 = arith.addf %42, %43 : vector<64x128xf32>
      %cst_21 = arith.constant 0.000000e+00 : f32
      %45 = vector.broadcast %cst_21 : f32 to vector<64x128xf32>
      %46 = arith.maximumf %44, %45 : vector<64x128xf32>
      %c0_22 = arith.constant 0 : index
      %c0_23 = arith.constant 0 : index
      %47 = vector.load %arg4[%c0_22, %c0_23] : memref<32x64xf32, #tpu.memory_space<vmem>>, vector<32x64xf32>
      %cst_24 = arith.constant dense<0.000000e+00> : vector<32x128xf32>
      %48 = tpu.matmul %47, %46, %cst_24 {dimension_numbers = #tpu.dot_dimension_numbers<[1], [0], [0], [1], [0, 0, 1, 1], [], []>} : vector<32x64xf32>, vector<64x128xf32>, vector<32x128xf32> -> vector<32x128xf32>
      %cst_25 = arith.constant 0.000000e+00 : f32
      %49 = vector.shape_cast %10 : vector<1x128xi1> to vector<1x128xi1>
      %50 = vector.broadcast %49 : vector<1x128xi1> to vector<32x128xi1>
      %51 = vector.broadcast %cst_25 : f32 to vector<32x128xf32>
      %52 = arith.select %50, %48, %51 : vector<32x128xi1>, vector<32x128xf32>
      %c0_26 = arith.constant 0 : index
      %c0_27 = arith.constant 0 : index
      %53 = vector.load %arg14[%c0_26, %c0_27] : memref<32x1xf32, #tpu.memory_space<vmem>>, vector<32x1xf32>
      %cst_28 = arith.constant dense<0.000000e+00> : vector<32xf32>
      %54 = vector.multi_reduction <add>, %52, %cst_28 [1] : vector<32x128xf32> to vector<32xf32>
      %55 = vector.shape_cast %54 : vector<32xf32> to vector<32x1xf32>
      %56 = arith.addf %53, %55 : vector<32x1xf32>
      %c0_29 = arith.constant 0 : index
      %c0_30 = arith.constant 0 : index
      %57 = vector.load %arg14[%c0_29, %c0_30] : memref<32x1xf32, #tpu.memory_space<vmem>>, vector<32x1xf32>
      tpu.vector_store %arg14[%c0_29, %c0_30], %56 {strides = array<i32>} : memref<32x1xf32, #tpu.memory_space<vmem>>, vector<32x1xf32>,
      %c0_31 = arith.constant 0 : index
      %c0_32 = arith.constant 0 : index
      %58 = vector.load %arg15[%c0_31, %c0_32] : memref<32x1xf32, #tpu.memory_space<vmem>>, vector<32x1xf32>
      %59 = arith.mulf %52, %52 : vector<32x128xf32>
      %cst_33 = arith.constant dense<0.000000e+00> : vector<32xf32>
      %60 = vector.multi_reduction <add>, %59, %cst_33 [1] : vector<32x128xf32> to vector<32xf32>
      %61 = vector.shape_cast %60 : vector<32xf32> to vector<32x1xf32>
      %62 = arith.addf %58, %61 : vector<32x1xf32>
      %c0_34 = arith.constant 0 : index
      %c0_35 = arith.constant 0 : index
      %63 = vector.load %arg15[%c0_34, %c0_35] : memref<32x1xf32, #tpu.memory_space<vmem>>, vector<32x1xf32>
      tpu.vector_store %arg15[%c0_34, %c0_35], %62 {strides = array<i32>} : memref<32x1xf32, #tpu.memory_space<vmem>>, vector<32x1xf32>,
      %c128_i32_36 = arith.constant 128 : i32
      %64 = arith.muli %arg1, %c128_i32_36 : i32
      %65 = tpu.assume_multiple %64, 128 : i32
      %c0_37 = arith.constant 0 : index
      %66 = arith.index_cast %65 : i32 to index
      %67 = vector.load %arg16[%c0_37, %66] : memref<32x128xf32, #tpu.memory_space<vmem>>, vector<32x128xf32>
      tpu.vector_store %arg16[%c0_37, %66], %52 {strides = array<i32>} : memref<32x128xf32, #tpu.memory_space<vmem>>, vector<32x128xf32>,
    } else {
    }
    %c2_i32 = arith.constant 2 : i32
    %17 = arith.cmpi eq, %arg0, %c2_i32 : i32
    %18 = arith.extui %17 : i1 to i32
    %c0_i32_5 = arith.constant 0 : i32
    %19 = arith.cmpi ne, %18, %c0_i32_5 : i32
    scf.if %19 {
      %c128_i32_6 = arith.constant 128 : i32
      %20 = arith.muli %arg1, %c128_i32_6 : i32
      %21 = tpu.assume_multiple %20, 128 : i32
      %c0 = arith.constant 0 : index
      %22 = arith.index_cast %21 : i32 to index
      %23 = vector.load %arg16[%c0, %22] : memref<32x128xf32, #tpu.memory_space<vmem>>, vector<32x128xf32>
      %c0_7 = arith.constant 0 : index
      %c0_8 = arith.constant 0 : index
      %24 = vector.load %arg14[%c0_7, %c0_8] : memref<32x1xf32, #tpu.memory_space<vmem>>, vector<32x1xf32>
      %cst = arith.constant 1.562500e-02 : f32
      %25 = vector.broadcast %cst : f32 to vector<32x1xf32>
      %26 = arith.mulf %24, %25 : vector<32x1xf32>
      %c0_9 = arith.constant 0 : index
      %c0_10 = arith.constant 0 : index
      %27 = vector.load %arg15[%c0_9, %c0_10] : memref<32x1xf32, #tpu.memory_space<vmem>>, vector<32x1xf32>
      %cst_11 = arith.constant 1.562500e-02 : f32
      %28 = vector.broadcast %cst_11 : f32 to vector<32x1xf32>
      %29 = arith.mulf %27, %28 : vector<32x1xf32>
      %30 = arith.mulf %26, %26 : vector<32x1xf32>
      %31 = arith.subf %29, %30 : vector<32x1xf32>
      %cst_12 = arith.constant 0.000000e+00 : f32
      %32 = vector.broadcast %cst_12 : f32 to vector<32x1xf32>
      %33 = arith.maximumf %31, %32 : vector<32x1xf32>
      %c0_13 = arith.constant 0 : index
      %c0_14 = arith.constant 0 : index
      %34 = vector.load %arg8[%c0_13, %c0_14] : memref<32x1xf32, #tpu.memory_space<vmem>>, vector<32x1xf32>
      %cst_15 = arith.constant 9.99999974E-6 : f32
      %35 = vector.broadcast %cst_15 : f32 to vector<32x1xf32>
      %36 = arith.addf %33, %35 : vector<32x1xf32>
      %37 = math.rsqrt %36 : vector<32x1xf32>
      %38 = arith.mulf %34, %37 : vector<32x1xf32>
      %c0_16 = arith.constant 0 : index
      %c0_17 = arith.constant 0 : index
      %39 = vector.load %arg9[%c0_16, %c0_17] : memref<32x1xf32, #tpu.memory_space<vmem>>, vector<32x1xf32>
      %40 = arith.mulf %26, %38 : vector<32x1xf32>
      %41 = arith.subf %39, %40 : vector<32x1xf32>
      %42 = vector.broadcast %38 : vector<32x1xf32> to vector<32x128xf32>
      %43 = arith.mulf %23, %42 : vector<32x128xf32>
      %44 = vector.broadcast %41 : vector<32x1xf32> to vector<32x128xf32>
      %45 = arith.addf %43, %44 : vector<32x128xf32>
      %cst_18 = arith.constant 0.000000e+00 : f32
      %46 = vector.broadcast %cst_18 : f32 to vector<32x128xf32>
      %47 = arith.maximumf %45, %46 : vector<32x128xf32>
      %c0_19 = arith.constant 0 : index
      %c0_20 = arith.constant 0 : index
      %48 = vector.load %arg5[%c0_19, %c0_20] : memref<1x32xf32, #tpu.memory_space<vmem>>, vector<1x32xf32>
      %cst_21 = arith.constant dense<0.000000e+00> : vector<1x128xf32>
      %49 = tpu.matmul %48, %47, %cst_21 {dimension_numbers = #tpu.dot_dimension_numbers<[1], [0], [0], [1], [0, 0, 1, 1], [], []>} : vector<1x32xf32>, vector<32x128xf32>, vector<1x128xf32> -> vector<1x128xf32>
      %c0_22 = arith.constant 0 : index
      %c0_23 = arith.constant 0 : index
      %50 = vector.load %arg10[%c0_22, %c0_23] : memref<1x1xf32, #tpu.memory_space<vmem>>, vector<1x1xf32>
      %51 = vector.broadcast %50 : vector<1x1xf32> to vector<1x128xf32>
      %52 = arith.addf %49, %51 : vector<1x128xf32>
      %c0_24 = arith.constant 0 : index
      %c0_25 = arith.constant 0 : index
      %53 = vector.load %arg11[%c0_24, %c0_25] : memref<1x128xf32, #tpu.memory_space<vmem>>, vector<1x128xf32>
      tpu.vector_store %arg11[%c0_24, %c0_25], %52 {strides = array<i32>} : memref<1x128xf32, #tpu.memory_space<vmem>>, vector<1x128xf32>,
    } else {
    }
    return
  }
  func.func @transform_0(%arg0: i32, %arg1: i32) -> (i32, i32) {
    %c0_i32 = arith.constant 0 : i32
    %c0_i32_0 = arith.constant 0 : i32
    %c0_i32_1 = arith.constant 0 : i32
    return %c0_i32, %c0_i32_0 : i32, i32
  }
  func.func @transform_1(%arg0: i32, %arg1: i32) -> (i32, i32) {
    %c0_i32 = arith.constant 0 : i32
    %c0_i32_0 = arith.constant 0 : i32
    %c0_i32_1 = arith.constant 0 : i32
    return %c0_i32, %c0_i32_0 : i32, i32
  }
  func.func @transform_2(%arg0: i32, %arg1: i32) -> (i32, i32) {
    %c0_i32 = arith.constant 0 : i32
    %c0_i32_0 = arith.constant 0 : i32
    %c0_i32_1 = arith.constant 0 : i32
    return %c0_i32, %c0_i32_0 : i32, i32
  }
  func.func @transform_3(%arg0: i32, %arg1: i32) -> (i32, i32) {
    %c0_i32 = arith.constant 0 : i32
    %c0_i32_0 = arith.constant 0 : i32
    %c0_i32_1 = arith.constant 0 : i32
    return %c0_i32, %c0_i32_0 : i32, i32
  }
  func.func @transform_4(%arg0: i32, %arg1: i32) -> (i32, i32) {
    %c0_i32 = arith.constant 0 : i32
    %c0_i32_0 = arith.constant 0 : i32
    %c0_i32_1 = arith.constant 0 : i32
    return %c0_i32, %c0_i32_0 : i32, i32
  }
  func.func @transform_5(%arg0: i32, %arg1: i32) -> (i32, i32) {
    %c0_i32 = arith.constant 0 : i32
    %c0_i32_0 = arith.constant 0 : i32
    %c0_i32_1 = arith.constant 0 : i32
    return %c0_i32, %c0_i32_0 : i32, i32
  }
  func.func @transform_6(%arg0: i32, %arg1: i32) -> (i32, i32) {
    %c0_i32 = arith.constant 0 : i32
    %c0_i32_0 = arith.constant 0 : i32
    %c0_i32_1 = arith.constant 0 : i32
    return %c0_i32, %c0_i32_0 : i32, i32
  }
  func.func @transform_7(%arg0: i32, %arg1: i32) -> (i32, i32) {
    %c0_i32 = arith.constant 0 : i32
    %c0_i32_0 = arith.constant 0 : i32
    %c0_i32_1 = arith.constant 0 : i32
    return %c0_i32, %c0_i32_0 : i32, i32
  }
  func.func @transform_8(%arg0: i32, %arg1: i32) -> (i32, i32) {
    %c0_i32 = arith.constant 0 : i32
    %c0_i32_0 = arith.constant 0 : i32
    %c0_i32_1 = arith.constant 0 : i32
    return %c0_i32, %c0_i32_0 : i32, i32
  }
  func.func @transform_9(%arg0: i32, %arg1: i32) -> (i32, i32) {
    %c0_i32 = arith.constant 0 : i32
    %c0_i32_0 = arith.constant 0 : i32
    %c0_i32_1 = arith.constant 0 : i32
    return %c0_i32, %c0_i32_0 : i32, i32
  }
}

</mosaic_0001>

<llo_original>
// kernel: tpu_custom_call.1
$region0: #{tpu_custom_call.1}
  #allocation0 [shape = 'u32[]', space=smem, size = 0x4, offset = 0x4, fixed_abs, tag = 'smem constant byte address 0x4 - core index']
  #allocation1 [shape = 'u32[144,128]{1,0:T(1,128)}', space=vmem, size = 0x12000, scoped, tag = 'internal scratch']
  #allocation2 [shape = 'f32[64,1]{1,0:T(8,128)}', space=vmem, size = 0x8000, scoped, tag = 'scratch operand']
  #allocation3 [shape = 'f32[64,1]{1,0:T(8,128)}', space=vmem, size = 0x8000, scoped, tag = 'scratch operand']
  #allocation4 [shape = 'f32[32,1]{1,0:T(8,128)}', space=vmem, size = 0x4000, scoped, tag = 'scratch operand']
  #allocation5 [shape = 'f32[32,1]{1,0:T(8,128)}', space=vmem, size = 0x4000, scoped, tag = 'scratch operand']
  #allocation6 [shape = 'f32[32,128]{1,0:T(8,128)}', space=vmem, size = 0x4000, scoped, tag = 'scratch operand']
  #allocation7 [shape = 'f32[1,1]{1,0:T(1,128)S(1)}', space=vmem, size = 0x200, scoped, tag = 'scoped memory for tpu_custom_call.1']
  %s0 = inlined_call_operand.vmem [shape: f32[64,64], index: 0, kind: input, shape index: {}]
  %s1 = inlined_call_operand.vmem [shape: f32[64,64], index: 1, kind: input, shape index: {}]
  %s2 = inlined_call_operand.vmem [shape: f32[32,64], index: 2, kind: input, shape index: {}]
  %s3 = inlined_call_operand.vmem [shape: f32[1,32], index: 3, kind: input, shape index: {}]
  %s4 = inlined_call_operand.vmem [shape: f32[64,1], index: 4, kind: input, shape index: {}]
  %s5 = inlined_call_operand.vmem [shape: f32[64,1], index: 5, kind: input, shape index: {}]
  %s6 = inlined_call_operand.vmem [shape: f32[32,1], index: 6, kind: input, shape index: {}]
  %s7 = inlined_call_operand.vmem [shape: f32[32,1], index: 7, kind: input, shape index: {}]
  %s8 = inlined_call_operand.<no memory space> [shape: f32[1,1], index: 8, kind: input, shape index: {}]
  %s9 = inlined_call_operand.hbm [shape: f32[1,64], index: 9, kind: output, shape index: {}]
  %s10 = sld [smem:[#allocation0]]
  $region85: #{tpu_custom_call.1} parent=0
    _
  %s12 = ssub.s32 1, %s10
  %s13 = scalar_select 0, %s12, %s10
  %v14 = vstv %s8
  %15 = vst [vmem:[#allocation7] sm:$0x1] %v14
  $region1: #{tpu_custom_call.1} parent=0
    #allocation8 [shape = 'u8[512]{0}', space=vmem, size = 0x400, scoped, tag = 'output window, operand 0, single buffered']
    #allocation9 [shape = 's32[2]{0}', space=sflag, size = 0x8, scoped, tag = 'scoped memory for tpu_custom_call.1']
    %16 = vsyncpa [#allocation9], 0
    loop: start=0, step=1, limit=5
    $region2: #{tpu_custom_call.1} parent=1 // loop_pre_header
      _
    $region3: #{tpu_custom_call.1} parent=1 // loop_header
      %s18 = sphi 0, %s22
      %p19 = scmp.ge.s32.totalorder %s18, 5
      %s25 = sphi 0, %s37
      %s26 = sphi 0, %s33
      %s27 = sphi 0, %s25
      %s28 = sphi 0, %s26
      %s29 = sphi 0, %s27
      %s30 = sphi 0, %s28
      %s38 = sphi 0, %s38
      %s40 = sphi 0, %s38
      %s41 = sphi 0, %s40
      %s55 = sphi 0, %s41
      %s59 = sphi 0, %s59
      %s61 = sphi 0, %s59
      %s62 = sphi 0, %s61
      %s76 = sphi 0, %s62
      %s80 = sphi 0, %s80
      %s82 = sphi 0, %s80
      %s83 = sphi 0, %s82
      %s97 = sphi 0, %s83
      %s101 = sphi 0, %s101
      %s103 = sphi 0, %s101
      %s104 = sphi 0, %s103
      %s118 = sphi 0, %s104
      %s122 = sphi 0, %s122
      %s124 = sphi 0, %s122
      %s125 = sphi 0, %s124
      %s139 = sphi 0, %s125
      %s143 = sphi 0, %s143
      %s145 = sphi 0, %s143
      %s146 = sphi 0, %s145
      %s160 = sphi 0, %s146
      %s164 = sphi 0, %s164
      %s166 = sphi 0, %s164
      %s167 = sphi 0, %s166
      %s181 = sphi 0, %s167
      %s185 = sphi 0, %s185
      %s187 = sphi 0, %s185
      %s188 = sphi 0, %s187
      %s202 = sphi 0, %s188
      %s206 = sphi 0, %s206
      %s208 = sphi 0, %s206
      %s209 = sphi 0, %s208
      %s223 = sphi 0, %s209
      %s227 = sphi 0, %s227
      %s229 = sphi 0, %s227
      %s230 = sphi 0, %s229
      %s244 = sphi 0, %s230
    $region4: #{tpu_custom_call.1} parent=1 // loop_header_branch
      %21 = sbr.rel (%p19) target = $region8
    $region5: #{tpu_custom_call.1} parent=1 // loop_body
      %s23 = ssub.s32 %s18, 1
      %s24 = ssub.s32 %s18, 2
      %s31 = sadd.s32 1, %s26
      %p32 = scmp.ge.s32.totalorder %s31, 1
      %s33 = scalar_select %p32, 0, %s31
      %s34 = sadd.s32 1, %s25
      %s35 = scalar_select %p32, %s34, %s25
      %p36 = scmp.ge.s32.totalorder %s35, 3
      %s37 = scalar_select %p36, 0, %s35
      %s39 = sadd.s32 %s38, 1
      %p42 = scmp.eq.s32.totalorder %s18, 2
      %p43 = scmp.ne.s32.totalorder %s38, %s40
      %p44 = scmp.eq.s32.totalorder %s18, 0
      %p45 = por %p43, %p44
      %p46 = scmp.ne.s32.totalorder %s38, %s40
      %p47 = scmp.eq.s32.totalorder %s23, 2
      %p48 = por %p46, %p47
      %p49 = scmp.ne.s32.totalorder %s40, %s41
      %p50 = scmp.eq.s32.totalorder %s23, 0
      %p51 = por %p49, %p50
      %p52 = scmp.ne.s32.totalorder %s40, %s41
      %p53 = scmp.eq.s32.totalorder %s24, 2
      %p54 = por %p52, %p53
      %p56 = scmp.ne.s32.totalorder %s41, %s55
      %p57 = scmp.eq.s32.totalorder %s24, 0
      %p58 = por %p56, %p57
      %s60 = sadd.s32 %s59, 1
      %p63 = scmp.eq.s32.totalorder %s18, 2
      %p64 = scmp.ne.s32.totalorder %s59, %s61
      %p65 = scmp.eq.s32.totalorder %s18, 0
      %p66 = por %p64, %p65
      %p67 = scmp.ne.s32.totalorder %s59, %s61
      %p68 = scmp.eq.s32.totalorder %s23, 2
      %p69 = por %p67, %p68
      %p70 = scmp.ne.s32.totalorder %s61, %s62
      %p71 = scmp.eq.s32.totalorder %s23, 0
      %p72 = por %p70, %p71
      %p73 = scmp.ne.s32.totalorder %s61, %s62
      %p74 = scmp.eq.s32.totalorder %s24, 2
      %p75 = por %p73, %p74
      %p77 = scmp.ne.s32.totalorder %s62, %s76
      %p78 = scmp.eq.s32.totalorder %s24, 0
      %p79 = por %p77, %p78
      %s81 = sadd.s32 %s80, 1
      %p84 = scmp.eq.s32.totalorder %s18, 2
      %p85 = scmp.ne.s32.totalorder %s80, %s82
      %p86 = scmp.eq.s32.totalorder %s18, 0
      %p87 = por %p85, %p86
      %p88 = scmp.ne.s32.totalorder %s80, %s82
      %p89 = scmp.eq.s32.totalorder %s23, 2
      %p90 = por %p88, %p89
      %p91 = scmp.ne.s32.totalorder %s82, %s83
      %p92 = scmp.eq.s32.totalorder %s23, 0
      %p93 = por %p91, %p92
      %p94 = scmp.ne.s32.totalorder %s82, %s83
      %p95 = scmp.eq.s32.totalorder %s24, 2
      %p96 = por %p94, %p95
      %p98 = scmp.ne.s32.totalorder %s83, %s97
      %p99 = scmp.eq.s32.totalorder %s24, 0
      %p100 = por %p98, %p99
      %s102 = sadd.s32 %s101, 1
      %p105 = scmp.eq.s32.totalorder %s18, 2
      %p106 = scmp.ne.s32.totalorder %s101, %s103
      %p107 = scmp.eq.s32.totalorder %s18, 0
      %p108 = por %p106, %p107
      %p109 = scmp.ne.s32.totalorder %s101, %s103
      %p110 = scmp.eq.s32.totalorder %s23, 2
      %p111 = por %p109, %p110
      %p112 = scmp.ne.s32.totalorder %s103, %s104
      %p113 = scmp.eq.s32.totalorder %s23, 0
      %p114 = por %p112, %p113
      %p115 = scmp.ne.s32.totalorder %s103, %s104
      %p116 = scmp.eq.s32.totalorder %s24, 2
      %p117 = por %p115, %p116
      %p119 = scmp.ne.s32.totalorder %s104, %s118
      %p120 = scmp.eq.s32.totalorder %s24, 0
      %p121 = por %p119, %p120
      %s123 = sadd.s32 %s122, 1
      %p126 = scmp.eq.s32.totalorder %s18, 2
      %p127 = scmp.ne.s32.totalorder %s122, %s124
      %p128 = scmp.eq.s32.totalorder %s18, 0
      %p129 = por %p127, %p128
      %p130 = scmp.ne.s32.totalorder %s122, %s124
      %p131 = scmp.eq.s32.totalorder %s23, 2
      %p132 = por %p130, %p131
      %p133 = scmp.ne.s32.totalorder %s124, %s125
      %p134 = scmp.eq.s32.totalorder %s23, 0
      %p135 = por %p133, %p134
      %p136 = scmp.ne.s32.totalorder %s124, %s125
      %p137 = scmp.eq.s32.totalorder %s24, 2
      %p138 = por %p136, %p137
      %p140 = scmp.ne.s32.totalorder %s125, %s139
      %p141 = scmp.eq.s32.totalorder %s24, 0
      %p142 = por %p140, %p141
      %s144 = sadd.s32 %s143, 1
      %p147 = scmp.eq.s32.totalorder %s18, 2
      %p148 = scmp.ne.s32.totalorder %s143, %s145
      %p149 = scmp.eq.s32.totalorder %s18, 0
      %p150 = por %p148, %p149
      %p151 = scmp.ne.s32.totalorder %s143, %s145
      %p152 = scmp.eq.s32.totalorder %s23, 2
      %p153 = por %p151, %p152
      %p154 = scmp.ne.s32.totalorder %s145, %s146
      %p155 = scmp.eq.s32.totalorder %s23, 0
      %p156 = por %p154, %p155
      %p157 = scmp.ne.s32.totalorder %s145, %s146
      %p158 = scmp.eq.s32.totalorder %s24, 2
      %p159 = por %p157, %p158
      %p161 = scmp.ne.s32.totalorder %s146, %s160
      %p162 = scmp.eq.s32.totalorder %s24, 0
      %p163 = por %p161, %p162
      %s165 = sadd.s32 %s164, 1
      %p168 = scmp.eq.s32.totalorder %s18, 2
      %p169 = scmp.ne.s32.totalorder %s164, %s166
      %p170 = scmp.eq.s32.totalorder %s18, 0
      %p171 = por %p169, %p170
      %p172 = scmp.ne.s32.totalorder %s164, %s166
      %p173 = scmp.eq.s32.totalorder %s23, 2
      %p174 = por %p172, %p173
      %p175 = scmp.ne.s32.totalorder %s166, %s167
      %p176 = scmp.eq.s32.totalorder %s23, 0
      %p177 = por %p175, %p176
      %p178 = scmp.ne.s32.totalorder %s166, %s167
      %p179 = scmp.eq.s32.totalorder %s24, 2
      %p180 = por %p178, %p179
      %p182 = scmp.ne.s32.totalorder %s167, %s181
      %p183 = scmp.eq.s32.totalorder %s24, 0
      %p184 = por %p182, %p183
      %s186 = sadd.s32 %s185, 1
      %p189 = scmp.eq.s32.totalorder %s18, 2
      %p190 = scmp.ne.s32.totalorder %s185, %s187
      %p191 = scmp.eq.s32.totalorder %s18, 0
      %p192 = por %p190, %p191
      %p193 = scmp.ne.s32.totalorder %s185, %s187
      %p194 = scmp.eq.s32.totalorder %s23, 2
      %p195 = por %p193, %p194
      %p196 = scmp.ne.s32.totalorder %s187, %s188
      %p197 = scmp.eq.s32.totalorder %s23, 0
      %p198 = por %p196, %p197
      %p199 = scmp.ne.s32.totalorder %s187, %s188
      %p200 = scmp.eq.s32.totalorder %s24, 2
      %p201 = por %p199, %p200
      %p203 = scmp.ne.s32.totalorder %s188, %s202
      %p204 = scmp.eq.s32.totalorder %s24, 0
      %p205 = por %p203, %p204
      %s207 = sadd.s32 %s206, 1
      %p210 = scmp.eq.s32.totalorder %s18, 2
      %p211 = scmp.ne.s32.totalorder %s206, %s208
      %p212 = scmp.eq.s32.totalorder %s18, 0
      %p213 = por %p211, %p212
      %p214 = scmp.ne.s32.totalorder %s206, %s208
      %p215 = scmp.eq.s32.totalorder %s23, 2
      %p216 = por %p214, %p215
      %p217 = scmp.ne.s32.totalorder %s208, %s209
      %p218 = scmp.eq.s32.totalorder %s23, 0
      %p219 = por %p217, %p218
      %p220 = scmp.ne.s32.totalorder %s208, %s209
      %p221 = scmp.eq.s32.totalorder %s24, 2
      %p222 = por %p220, %p221
      %p224 = scmp.ne.s32.totalorder %s209, %s223
      %p225 = scmp.eq.s32.totalorder %s24, 0
      %p226 = por %p224, %p225
      %s228 = sadd.s32 %s227, 1
      %p231 = scmp.eq.s32.totalorder %s18, 2
      %p232 = scmp.ne.s32.totalorder %s227, %s229
      %p233 = scmp.eq.s32.totalorder %s18, 0
      %p234 = por %p232, %p233
      %p235 = scmp.ne.s32.totalorder %s227, %s229
      %p236 = scmp.eq.s32.totalorder %s23, 2
      %p237 = por %p235, %p236
      %p238 = scmp.ne.s32.totalorder %s229, %s230
      %p239 = scmp.eq.s32.totalorder %s23, 0
      %p240 = por %p238, %p239
      %p241 = scmp.ne.s32.totalorder %s229, %s230
      %p242 = scmp.eq.s32.totalorder %s24, 2
      %p243 = por %p241, %p242
      %p245 = scmp.ne.s32.totalorder %s230, %s244
      %p246 = scmp.eq.s32.totalorder %s24, 0
      %p247 = por %p245, %p246
      %p248 = scmp.le.s32.totalorder 1, %s18
      %p249 = scmp.lt.s32.totalorder %s18, 4
      %p250 = pnand %p248, %p249
      %p251 = pneg %p250
      // Predicated region
      $region9: #{tpu_custom_call.1} parent=5 // pred_check
        _
      $region10: #{tpu_custom_call.1} parent=5 // pred_check_branch
        %253 = sbr.rel (%p250) target = $region12
      $region11: #{tpu_custom_call.1} parent=5 // pred_region
        %s254 = ssub.s32 %s18, 1
        // Predicated region
        $region13: #{tpu_custom_call.1} parent=11 // pred_check
          %p255 = pneg %p51
        $region14: #{tpu_custom_call.1} parent=11 // pred_check_branch
          %257 = sbr.rel (%p255) target = $region16
        $region15: #{tpu_custom_call.1} parent=11 // pred_region
          _
        $region16: #{tpu_custom_call.1} parent=11 // pred_fallthru
          _
        // Predicated region
        $region17: #{tpu_custom_call.1} parent=11 // pred_check
          %p258 = pneg %p72
        $region18: #{tpu_custom_call.1} parent=11 // pred_check_branch
          %260 = sbr.rel (%p258) target = $region20
        $region19: #{tpu_custom_call.1} parent=11 // pred_region
          _
        $region20: #{tpu_custom_call.1} parent=11 // pred_fallthru
          _
        // Predicated region
        $region21: #{tpu_custom_call.1} parent=11 // pred_check
          %p261 = pneg %p93
        $region22: #{tpu_custom_call.1} parent=11 // pred_check_branch
          %263 = sbr.rel (%p261) target = $region24
        $region23: #{tpu_custom_call.1} parent=11 // pred_region
          _
        $region24: #{tpu_custom_call.1} parent=11 // pred_fallthru
          _
        // Predicated region
        $region25: #{tpu_custom_call.1} parent=11 // pred_check
          %p264 = pneg %p114
        $region26: #{tpu_custom_call.1} parent=11 // pred_check_branch
          %266 = sbr.rel (%p264) target = $region28
        $region27: #{tpu_custom_call.1} parent=11 // pred_region
          _
        $region28: #{tpu_custom_call.1} parent=11 // pred_fallthru
          _
        // Predicated region
        $region29: #{tpu_custom_call.1} parent=11 // pred_check
          %p267 = pneg %p135
        $region30: #{tpu_custom_call.1} parent=11 // pred_check_branch
          %269 = sbr.rel (%p267) target = $region32
        $region31: #{tpu_custom_call.1} parent=11 // pred_region
          _
        $region32: #{tpu_custom_call.1} parent=11 // pred_fallthru
          _
        // Predicated region
        $region33: #{tpu_custom_call.1} parent=11 // pred_check
          %p270 = pneg %p156
        $region34: #{tpu_custom_call.1} parent=11 // pred_check_branch
          %272 = sbr.rel (%p270) target = $region36
        $region35: #{tpu_custom_call.1} parent=11 // pred_region
          _
        $region36: #{tpu_custom_call.1} parent=11 // pred_fallthru
          _
        // Predicated region
        $region37: #{tpu_custom_call.1} parent=11 // pred_check
          %p273 = pneg %p177
        $region38: #{tpu_custom_call.1} parent=11 // pred_check_branch
          %275 = sbr.rel (%p273) target = $region40
        $region39: #{tpu_custom_call.1} parent=11 // pred_region
          _
        $region40: #{tpu_custom_call.1} parent=11 // pred_fallthru
          _
        // Predicated region
        $region41: #{tpu_custom_call.1} parent=11 // pred_check
          %p276 = pneg %p198
        $region42: #{tpu_custom_call.1} parent=11 // pred_check_branch
          %278 = sbr.rel (%p276) target = $region44
        $region43: #{tpu_custom_call.1} parent=11 // pred_region
          _
        $region44: #{tpu_custom_call.1} parent=11 // pred_fallthru
          _
        // Predicated region
        $region45: #{tpu_custom_call.1} parent=11 // pred_check
          %p279 = pneg %p219
        $region46: #{tpu_custom_call.1} parent=11 // pred_check_branch
          %281 = sbr.rel (%p279) target = $region48
        $region47: #{tpu_custom_call.1} parent=11 // pred_region
          _
        $region48: #{tpu_custom_call.1} parent=11 // pred_fallthru
          _
      $region12: #{tpu_custom_call.1} parent=5 // pred_fallthru
        _
      %p282 = scmp.lt.s32.totalorder %s18, 3
      // Predicated region
      $region49: #{tpu_custom_call.1} parent=5 // pred_check
        %p283 = pneg %p282
      $region50: #{tpu_custom_call.1} parent=5 // pred_check_branch
        %285 = sbr.rel (%p283) target = $region52
      $region51: #{tpu_custom_call.1} parent=5 // pred_region
        _
      $region52: #{tpu_custom_call.1} parent=5 // pred_fallthru
        _
      %p286 = scmp.le.s32.totalorder 1, %s18
      %p287 = scmp.lt.s32.totalorder %s18, 4
      %p288 = pnand %p286, %p287
      %p289 = pneg %p288
      // Predicated region
      $region53: #{tpu_custom_call.1} parent=5 // pred_check
        _
      $region54: #{tpu_custom_call.1} parent=5 // pred_check_branch
        %291 = sbr.rel (%p288) target = $region56
      $region55: #{tpu_custom_call.1} parent=5 // pred_region
        %s292 = ssub.s32 %s18, 1
        %p293 = pneg %p51
        %p294 = pneg %p48
        %p295 = pneg %p72
        %p296 = pneg %p69
        %p297 = pneg %p93
        %p298 = pneg %p90
        %p299 = pneg %p114
        %p300 = pneg %p111
        %p301 = pneg %p135
        %p302 = pneg %p132
        %p303 = pneg %p156
        %p304 = pneg %p153
        %p305 = pneg %p177
        %p306 = pneg %p174
        %p307 = pneg %p198
        %p308 = pneg %p195
        %p309 = pneg %p219
        %p310 = pneg %p216
        %p311 = pneg %p240
        %p312 = pneg %p237
        %p313 = scmp.eq.s32.totalorder %s27, 0
        %p314 = scmp.eq.s32.totalorder %s28, 0
        %p315 = pnand %p313, %p314
        %p316 = pneg %p315
        // Predicated region
        $region57: #{tpu_custom_call.1} parent=55 // pred_check
          _
        $region58: #{tpu_custom_call.1} parent=55 // pred_check_branch
          %318 = sbr.rel (%p315) target = $region60
        $region59: #{tpu_custom_call.1} parent=55 // pred_region
          %vm319 = vcmask 7168
          %320 = vst.msk [vmem:[#allocation2] sm:$0xff] %vm319, 0.0
          %321 = vst.msk [vmem:[#allocation2 + $0x8] sm:$0xff] %vm319, 0.0
          %322 = vst.msk [vmem:[#allocation2 + $0x10] sm:$0xff] %vm319, 0.0
          %323 = vst.msk [vmem:[#allocation2 + $0x18] sm:$0xff] %vm319, 0.0
          %324 = vst.msk [vmem:[#allocation2 + $0x20] sm:$0xff] %vm319, 0.0
          %325 = vst.msk [vmem:[#allocation2 + $0x28] sm:$0xff] %vm319, 0.0
          %326 = vst.msk [vmem:[#allocation2 + $0x30] sm:$0xff] %vm319, 0.0
          %327 = vst.msk [vmem:[#allocation2 + $0x38] sm:$0xff] %vm319, 0.0
          %328 = vst.msk [vmem:[#allocation3] sm:$0xff] %vm319, 0.0
          %329 = vst.msk [vmem:[#allocation3 + $0x8] sm:$0xff] %vm319, 0.0
          %330 = vst.msk [vmem:[#allocation3 + $0x10] sm:$0xff] %vm319, 0.0
          %331 = vst.msk [vmem:[#allocation3 + $0x18] sm:$0xff] %vm319, 0.0
          %332 = vst.msk [vmem:[#allocation3 + $0x20] sm:$0xff] %vm319, 0.0
          %333 = vst.msk [vmem:[#allocation3 + $0x28] sm:$0xff] %vm319, 0.0
          %334 = vst.msk [vmem:[#allocation3 + $0x30] sm:$0xff] %vm319, 0.0
          %335 = vst.msk [vmem:[#allocation3 + $0x38] sm:$0xff] %vm319, 0.0
          %336 = vst.msk [vmem:[#allocation4] sm:$0xff] %vm319, 0.0
          %337 = vst.msk [vmem:[#allocation4 + $0x8] sm:$0xff] %vm319, 0.0
          %338 = vst.msk [vmem:[#allocation4 + $0x10] sm:$0xff] %vm319, 0.0
          %339 = vst.msk [vmem:[#allocation4 + $0x18] sm:$0xff] %vm319, 0.0
          %340 = vst.msk [vmem:[#allocation5] sm:$0xff] %vm319, 0.0
          %341 = vst.msk [vmem:[#allocation5 + $0x8] sm:$0xff] %vm319, 0.0
          %342 = vst.msk [vmem:[#allocation5 + $0x10] sm:$0xff] %vm319, 0.0
          %343 = vst.msk [vmem:[#allocation5 + $0x18] sm:$0xff] %vm319, 0.0
        $region60: #{tpu_custom_call.1} parent=55 // pred_fallthru
          _
        %s344 = smul.u32 %s28, 128
        %v345 = vlaneseq
        %v346 = vand.u32 %v345, 127
        %v347 = vstv %s344
        %v348 = vadd.s32 %v347, %v346
        %vm349 = vcmp.lt.s32.totalorder %v348, 64
        // Predicated region
        $region61: #{tpu_custom_call.1} parent=55 // pred_check
          %p350 = pneg %p313
        $region62: #{tpu_custom_call.1} parent=55 // pred_check_branch
          %352 = sbr.rel (%p350) target = $region64
        $region63: #{tpu_custom_call.1} parent=55 // pred_region
          %v353 = vld [vmem:[%s0] sm:$0xff]
          %v354 = vld [vmem:[%s0 + $0x8] sm:$0xff]
          %v355 = vld [vmem:[%s0 + $0x10] sm:$0xff]
          %v356 = vld [vmem:[%s0 + $0x18] sm:$0xff]
          %v357 = vld [vmem:[%s0 + $0x20] sm:$0xff]
          %v358 = vld [vmem:[%s0 + $0x28] sm:$0xff]
          %v359 = vld [vmem:[%s0 + $0x30] sm:$0xff]
          %v360 = vld [vmem:[%s0 + $0x38] sm:$0xff]
          %v361 = vld [vmem:[%s0 + $0x40] sm:$0xff]
          %v362 = vld [vmem:[%s0 + $0x48] sm:$0xff]
          %v363 = vld [vmem:[%s0 + $0x50] sm:$0xff]
          %v364 = vld [vmem:[%s0 + $0x58] sm:$0xff]
          %v365 = vld [vmem:[%s0 + $0x60] sm:$0xff]
          %v366 = vld [vmem:[%s0 + $0x68] sm:$0xff]
          %v367 = vld [vmem:[%s0 + $0x70] sm:$0xff]
          %v368 = vld [vmem:[%s0 + $0x78] sm:$0xff]
          %v369 = vld [vmem:[%s1] sm:$0xff]
          %v370 = vld [vmem:[%s1 + $0x8] sm:$0xff]
          %v371 = vld [vmem:[%s1 + $0x10] sm:$0xff]
          %v372 = vld [vmem:[%s1 + $0x18] sm:$0xff]
          %v373 = vld [vmem:[%s1 + $0x20] sm:$0xff]
          %v374 = vld [vmem:[%s1 + $0x28] sm:$0xff]
          %v375 = vld [vmem:[%s1 + $0x30] sm:$0xff]
          %v376 = vld [vmem:[%s1 + $0x38] sm:$0xff]
          %vm377 = vcmask 523264
          %v379 = vsel %vm377, %v369, 0
          %v382 = vsel %vm377, %v370, 0
          %v385 = vsel %vm377, %v371, 0
          %v388 = vsel %vm377, %v372, 0
          %v391 = vsel %vm377, %v373, 0
          %v394 = vsel %vm377, %v374, 0
          %v397 = vsel %vm377, %v375, 0
          %v400 = vsel %vm377, %v376, 0
          %v403 = vsel %vm377, %v353, 0
          %v406 = vsel %vm377, %v354, 0
          %v409 = vsel %vm377, %v355, 0
          %v412 = vsel %vm377, %v356, 0
          %v415 = vsel %vm377, %v357, 0
          %v418 = vsel %vm377, %v358, 0
          %v421 = vsel %vm377, %v359, 0
          %v424 = vsel %vm377, %v360, 0
          %v427 = vsel %vm377, %v361, 0
          %v430 = vsel %vm377, %v362, 0
          %v433 = vsel %vm377, %v363, 0
          %v436 = vsel %vm377, %v364, 0
          %v439 = vsel %vm377, %v365, 0
          %v442 = vsel %vm377, %v366, 0
          %v445 = vsel %vm377, %v367, 0
          %v448 = vsel %vm377, %v368, 0
          %450 = vmatprep.subr.mxu0 0.0
          %451 = vmatpush1.xpose.msra.mxu0 %v448
          %452 = vmatprep.subr.mxu0 0.0
          %453 = vmatpush1.xpose.msra.mxu0 %v445
          %454 = vmatprep.subr.mxu0 0.0
          %455 = vmatpush1.xpose.msra.mxu0 %v442
          %456 = vmatprep.subr.mxu0 0.0
          %457 = vmatpush1.xpose.msra.mxu0 %v439
          %458 = vmatprep.subr.mxu0 0.0
          %459 = vmatpush1.xpose.msra.mxu0 %v436
          %460 = vmatprep.subr.mxu0 0.0
          %461 = vmatpush1.xpose.msra.mxu0 %v433
          %462 = vmatprep.subr.mxu0 0.0
          %463 = vmatpush1.xpose.msra.mxu0 %v430
          %464 = vmatprep.subr.mxu0 0.0
          %465 = vmatpush1.xpose.msra.mxu0 %v427
          %466 = vmatprep.subr.mxu0 0.0
          %467 = vmatpush1.xpose.msra.mxu0 %v424
          %468 = vmatprep.subr.mxu0 0.0
          %469 = vmatpush1.xpose.msra.mxu0 %v421
          %470 = vmatprep.subr.mxu0 0.0
          %471 = vmatpush1.xpose.msra.mxu0 %v418
          %472 = vmatprep.subr.mxu0 0.0
          %473 = vmatpush1.xpose.msra.mxu0 %v415
          %474 = vmatprep.subr.mxu0 0.0
          %475 = vmatpush1.xpose.msra.mxu0 %v412
          %476 = vmatprep.subr.mxu0 0.0
          %477 = vmatpush1.xpose.msra.mxu0 %v409
          %478 = vmatprep.subr.mxu0 0.0
          %479 = vmatpush1.xpose.msra.mxu0 %v406
          %480 = vmatprep.subr.mxu0 0.0
          %481 = vmatpush1.xpose.msra.mxu0 %v403
          %482 = vmatprep.subr.mxu0 0.0
          %483 = vmatpush2.xpose.msra.mxu0 0.0
          %484 = vmatprep.subr.mxu0 0.0
          %485 = vmatpush2.xpose.msra.mxu0 0.0
          %486 = vmatprep.subr.mxu0 0.0
          %487 = vmatpush2.xpose.msra.mxu0 0.0
          %488 = vmatprep.subr.mxu0 0.0
          %489 = vmatpush2.xpose.msra.mxu0 0.0
          %490 = vmatprep.subr.mxu0 0.0
          %491 = vmatpush2.xpose.msra.mxu0 0.0
          %492 = vmatprep.subr.mxu0 0.0
          %493 = vmatpush2.xpose.msra.mxu0 0.0
          %494 = vmatprep.subr.mxu0 0.0
          %495 = vmatpush2.xpose.msra.mxu0 0.0
          %496 = vmatprep.subr.mxu0 0.0
          %497 = vmatpush2.xpose.msra.mxu0 0.0
          %498 = vmatprep.subr.mxu0 0.0
          %499 = vmatpush2.xpose.msra.mxu0 0.0
          %500 = vmatprep.subr.mxu0 0.0
          %501 = vmatpush2.xpose.msra.mxu0 0.0
          %502 = vmatprep.subr.mxu0 0.0
          %503 = vmatpush2.xpose.msra.mxu0 0.0
          %504 = vmatprep.subr.mxu0 0.0
          %505 = vmatpush2.xpose.msra.mxu0 0.0
          %506 = vmatprep.subr.mxu0 0.0
          %507 = vmatpush2.xpose.msra.mxu0 0.0
          %508 = vmatprep.subr.mxu0 0.0
          %509 = vmatpush2.xpose.msra.mxu0 0.0
          %510 = vmatprep.subr.mxu0 0.0
          %511 = vmatpush2.xpose.msra.mxu0 0.0
          %512 = vmatprep.subr.mxu0 0.0
          %513 = vmatpush2.xpose.msra.mxu0 0.0
          %514 = vmatprep.mubr.f32.mxu0 0.0
          %515 = vmatmul.mubr.f32.gmra.mxu0 %v379
          %v516 = vpop.f32.mrf.mxu0
          %v517 = vadd.f32 0.0, %v516
          %v518 = vpop.f32.mrf.mxu0
          %519 = vmatprep.mubr.f32.mxu0 0.0
          %520 = vmatmul.mubr.f32.gmra.mxu0 %v382
          %v521 = vpop.f32.mrf.mxu0
          %v522 = vadd.f32 0.0, %v521
          %v523 = vpop.f32.mrf.mxu0
          %524 = vmatprep.mubr.f32.mxu0 0.0
          %525 = vmatmul.mubr.f32.gmra.mxu0 %v385
          %v526 = vpop.f32.mrf.mxu0
          %v527 = vadd.f32 0.0, %v526
          %v528 = vpop.f32.mrf.mxu0
          %529 = vmatprep.mubr.f32.mxu0 0.0
          %530 = vmatmul.mubr.f32.gmra.mxu0 %v388
          %v531 = vpop.f32.mrf.mxu0
          %v532 = vadd.f32 0.0, %v531
          %v533 = vpop.f32.mrf.mxu0
          %534 = vmatprep.mubr.f32.mxu0 0.0
          %535 = vmatmul.mubr.f32.gmra.mxu0 %v391
          %v536 = vpop.f32.mrf.mxu0
          %v537 = vadd.f32 0.0, %v536
          %v538 = vpop.f32.mrf.mxu0
          %539 = vmatprep.mubr.f32.mxu0 0.0
          %540 = vmatmul.mubr.f32.gmra.mxu0 %v394
          %v541 = vpop.f32.mrf.mxu0
          %v542 = vadd.f32 0.0, %v541
          %v543 = vpop.f32.mrf.mxu0
          %544 = vmatprep.mubr.f32.mxu0 0.0
          %545 = vmatmul.mubr.f32.gmra.mxu0 %v397
          %v546 = vpop.f32.mrf.mxu0
          %v547 = vadd.f32 0.0, %v546
          %v548 = vpop.f32.mrf.mxu0
          %549 = vmatprep.mubr.f32.mxu0 0.0
          %550 = vmatmul.mubr.f32.gmra.mxu0 %v400
          %v551 = vpop.f32.mrf.mxu0
          %v552 = vadd.f32 0.0, %v551
          %v553 = vpop.f32.mrf.mxu0
          %554 = vdwg.mxu0
          %v555 = vsel %vm349, 1, 0
          %vm556 = vcmp.eq.s32.totalorder %v555, 1
          %v557 = vsel %vm556, %v517, 0.0
          %v558 = vsel %vm556, %v522, 0.0
          %v559 = vsel %vm556, %v527, 0.0
          %v560 = vsel %vm556, %v532, 0.0
          %v561 = vsel %vm556, %v537, 0.0
          %v562 = vsel %vm556, %v542, 0.0
          %v563 = vsel %vm556, %v547, 0.0
          %v564 = vsel %vm556, %v552, 0.0
          %v565 = vld [vmem:[#allocation2] sm:$0xff]
          %v566 = vld [vmem:[#allocation2 + $0x8] sm:$0xff]
          %v567 = vld [vmem:[#allocation2 + $0x10] sm:$0xff]
          %v568 = vld [vmem:[#allocation2 + $0x18] sm:$0xff]
          %v569 = vld [vmem:[#allocation2 + $0x20] sm:$0xff]
          %v570 = vld [vmem:[#allocation2 + $0x28] sm:$0xff]
          %v571 = vld [vmem:[#allocation2 + $0x30] sm:$0xff]
          %v572 = vld [vmem:[#allocation2 + $0x38] sm:$0xff]
          %573 = vadd.xlane.f32.xlu0 %v557
          %v574 = vpop.xlane.xlu0 %573
          %575 = vadd.xlane.f32.xlu0 %v558
          %v576 = vpop.xlane.xlu0 %575
          %577 = vadd.xlane.f32.xlu0 %v559
          %v578 = vpop.xlane.xlu0 %577
          %579 = vadd.xlane.f32.xlu0 %v560
          %v580 = vpop.xlane.xlu0 %579
          %581 = vadd.xlane.f32.xlu0 %v561
          %v582 = vpop.xlane.xlu0 %581
          %583 = vadd.xlane.f32.xlu0 %v562
          %v584 = vpop.xlane.xlu0 %583
          %585 = vadd.xlane.f32.xlu0 %v563
          %v586 = vpop.xlane.xlu0 %585
          %587 = vadd.xlane.f32.xlu0 %v564
          %v588 = vpop.xlane.xlu0 %587
          %v589 = vadd.f32 %v565, %v574
          %v590 = vadd.f32 %v566, %v576
          %v591 = vadd.f32 %v567, %v578
          %v592 = vadd.f32 %v568, %v580
          %v593 = vadd.f32 %v569, %v582
          %v594 = vadd.f32 %v570, %v584
          %v595 = vadd.f32 %v571, %v586
          %v596 = vadd.f32 %v572, %v588
          %vm597 = vcmask 7168
          %598 = vst.msk [vmem:[#allocation2] sm:$0xff] %vm597, %v589
          %599 = vst.msk [vmem:[#allocation2 + $0x8] sm:$0xff] %vm597, %v590
          %600 = vst.msk [vmem:[#allocation2 + $0x10] sm:$0xff] %vm597, %v591
          %601 = vst.msk [vmem:[#allocation2 + $0x18] sm:$0xff] %vm597, %v592
          %602 = vst.msk [vmem:[#allocation2 + $0x20] sm:$0xff] %vm597, %v593
          %603 = vst.msk [vmem:[#allocation2 + $0x28] sm:$0xff] %vm597, %v594
          %604 = vst.msk [vmem:[#allocation2 + $0x30] sm:$0xff] %vm597, %v595
          %605 = vst.msk [vmem:[#allocation2 + $0x38] sm:$0xff] %vm597, %v596
          %v606 = vld [vmem:[#allocation3] sm:$0xff]
          %v607 = vld [vmem:[#allocation3 + $0x8] sm:$0xff]
          %v608 = vld [vmem:[#allocation3 + $0x10] sm:$0xff]
          %v609 = vld [vmem:[#allocation3 + $0x18] sm:$0xff]
          %v610 = vld [vmem:[#allocation3 + $0x20] sm:$0xff]
          %v611 = vld [vmem:[#allocation3 + $0x28] sm:$0xff]
          %v612 = vld [vmem:[#allocation3 + $0x30] sm:$0xff]
          %v613 = vld [vmem:[#allocation3 + $0x38] sm:$0xff]
          %v614 = vmul.f32 %v557, %v557
          %v615 = vmul.f32 %v558, %v558
          %v616 = vmul.f32 %v559, %v559
          %v617 = vmul.f32 %v560, %v560
          %v618 = vmul.f32 %v561, %v561
          %v619 = vmul.f32 %v562, %v562
          %v620 = vmul.f32 %v563, %v563
          %v621 = vmul.f32 %v564, %v564
          %622 = vadd.xlane.f32.xlu0 %v614
          %v623 = vpop.xlane.xlu0 %622
          %624 = vadd.xlane.f32.xlu0 %v615
          %v625 = vpop.xlane.xlu0 %624
          %626 = vadd.xlane.f32.xlu0 %v616
          %v627 = vpop.xlane.xlu0 %626
          %628 = vadd.xlane.f32.xlu0 %v617
          %v629 = vpop.xlane.xlu0 %628
          %630 = vadd.xlane.f32.xlu0 %v618
          %v631 = vpop.xlane.xlu0 %630
          %632 = vadd.xlane.f32.xlu0 %v619
          %v633 = vpop.xlane.xlu0 %632
          %634 = vadd.xlane.f32.xlu0 %v620
          %v635 = vpop.xlane.xlu0 %634
          %636 = vadd.xlane.f32.xlu0 %v621
          %v637 = vpop.xlane.xlu0 %636
          %v638 = vadd.f32 %v606, %v623
          %v639 = vadd.f32 %v607, %v625
          %v640 = vadd.f32 %v608, %v627
          %v641 = vadd.f32 %v609, %v629
          %v642 = vadd.f32 %v610, %v631
          %v643 = vadd.f32 %v611, %v633
          %v644 = vadd.f32 %v612, %v635
          %v645 = vadd.f32 %v613, %v637
          %646 = vst.msk [vmem:[#allocation3] sm:$0xff] %vm597, %v638
          %647 = vst.msk [vmem:[#allocation3 + $0x8] sm:$0xff] %vm597, %v639
          %648 = vst.msk [vmem:[#allocation3 + $0x10] sm:$0xff] %vm597, %v640
          %649 = vst.msk [vmem:[#allocation3 + $0x18] sm:$0xff] %vm597, %v641
          %650 = vst.msk [vmem:[#allocation3 + $0x20] sm:$0xff] %vm597, %v642
          %651 = vst.msk [vmem:[#allocation3 + $0x28] sm:$0xff] %vm597, %v643
          %652 = vst.msk [vmem:[#allocation3 + $0x30] sm:$0xff] %vm597, %v644
          %653 = vst.msk [vmem:[#allocation3 + $0x38] sm:$0xff] %vm597, %v645
        $region64: #{tpu_custom_call.1} parent=55 // pred_fallthru
          _
        %p654 = scmp.eq.s32.totalorder %s27, 1
        // Predicated region
        $region65: #{tpu_custom_call.1} parent=55 // pred_check
          %p655 = pneg %p654
        $region66: #{tpu_custom_call.1} parent=55 // pred_check_branch
          %657 = sbr.rel (%p655) target = $region68
        $region67: #{tpu_custom_call.1} parent=55 // pred_region
          %v658 = vld [vmem:[#allocation2] sm:$0xff]
          %v659 = vld [vmem:[#allocation2 + $0x8] sm:$0xff]
          %v660 = vld [vmem:[#allocation2 + $0x10] sm:$0xff]
          %v661 = vld [vmem:[#allocation2 + $0x18] sm:$0xff]
          %v662 = vld [vmem:[#allocation2 + $0x20] sm:$0xff]
          %v663 = vld [vmem:[#allocation2 + $0x28] sm:$0xff]
          %v664 = vld [vmem:[#allocation2 + $0x30] sm:$0xff]
          %v665 = vld [vmem:[#allocation2 + $0x38] sm:$0xff]
          %v666 = vmul.f32 %v658, 0.015625
          %v667 = vmul.f32 %v659, 0.015625
          %v668 = vmul.f32 %v660, 0.015625
          %v669 = vmul.f32 %v661, 0.015625
          %v670 = vmul.f32 %v662, 0.015625
          %v671 = vmul.f32 %v663, 0.015625
          %v672 = vmul.f32 %v664, 0.015625
          %v673 = vmul.f32 %v665, 0.015625
          %v674 = vld [vmem:[#allocation3] sm:$0xff]
          %v675 = vld [vmem:[#allocation3 + $0x8] sm:$0xff]
          %v676 = vld [vmem:[#allocation3 + $0x10] sm:$0xff]
          %v677 = vld [vmem:[#allocation3 + $0x18] sm:$0xff]
          %v678 = vld [vmem:[#allocation3 + $0x20] sm:$0xff]
          %v679 = vld [vmem:[#allocation3 + $0x28] sm:$0xff]
          %v680 = vld [vmem:[#allocation3 + $0x30] sm:$0xff]
          %v681 = vld [vmem:[#allocation3 + $0x38] sm:$0xff]
          %v682 = vmul.f32 %v674, 0.015625
          %v683 = vmul.f32 %v675, 0.015625
          %v684 = vmul.f32 %v676, 0.015625
          %v685 = vmul.f32 %v677, 0.015625
          %v686 = vmul.f32 %v678, 0.015625
          %v687 = vmul.f32 %v679, 0.015625
          %v688 = vmul.f32 %v680, 0.015625
          %v689 = vmul.f32 %v681, 0.015625
          %v690 = vmul.f32 %v666, %v666
          %v691 = vmul.f32 %v667, %v667
          %v692 = vmul.f32 %v668, %v668
          %v693 = vmul.f32 %v669, %v669
          %v694 = vmul.f32 %v670, %v670
          %v695 = vmul.f32 %v671, %v671
          %v696 = vmul.f32 %v672, %v672
          %v697 = vmul.f32 %v673, %v673
          %v698 = vsub.f32 %v682, %v690
          %v699 = vsub.f32 %v683, %v691
          %v700 = vsub.f32 %v684, %v692
          %v701 = vsub.f32 %v685, %v693
          %v702 = vsub.f32 %v686, %v694
          %v703 = vsub.f32 %v687, %v695
          %v704 = vsub.f32 %v688, %v696
          %v705 = vsub.f32 %v689, %v697
          %v706 = vmax.f32 %v698, 0.0
          %v707 = vmax.f32 %v699, 0.0
          %v708 = vmax.f32 %v700, 0.0
          %v709 = vmax.f32 %v701, 0.0
          %v710 = vmax.f32 %v702, 0.0
          %v711 = vmax.f32 %v703, 0.0
          %v712 = vmax.f32 %v704, 0.0
          %v713 = vmax.f32 %v705, 0.0
          %v714 = vld [vmem:[%s4] sm:$0xff]
          %v715 = vld [vmem:[%s4 + $0x8] sm:$0xff]
          %v716 = vld [vmem:[%s4 + $0x10] sm:$0xff]
          %v717 = vld [vmem:[%s4 + $0x18] sm:$0xff]
          %v718 = vld [vmem:[%s4 + $0x20] sm:$0xff]
          %v719 = vld [vmem:[%s4 + $0x28] sm:$0xff]
          %v720 = vld [vmem:[%s4 + $0x30] sm:$0xff]
          %v721 = vld [vmem:[%s4 + $0x38] sm:$0xff]
          %v722 = vadd.f32 %v706, 1e-05
          %v723 = vadd.f32 %v707, 1e-05
          %v724 = vadd.f32 %v708, 1e-05
          %v725 = vadd.f32 %v709, 1e-05
          %v726 = vadd.f32 %v710, 1e-05
          %v727 = vadd.f32 %v711, 1e-05
          %v728 = vadd.f32 %v712, 1e-05
          %v729 = vadd.f32 %v713, 1e-05
          %v730 = vrsqrt.pop %v722
          %v731 = vrsqrt.pop %v723
          %v732 = vrsqrt.pop %v724
          %v733 = vrsqrt.pop %v725
          %v734 = vrsqrt.pop %v726
          %v735 = vrsqrt.pop %v727
          %v736 = vrsqrt.pop %v728
          %v737 = vrsqrt.pop %v729
          %v738 = vmul.f32 %v714, %v730
          %v739 = vmul.f32 %v715, %v731
          %v740 = vmul.f32 %v716, %v732
          %v741 = vmul.f32 %v717, %v733
          %v742 = vmul.f32 %v718, %v734
          %v743 = vmul.f32 %v719, %v735
          %v744 = vmul.f32 %v720, %v736
          %v745 = vmul.f32 %v721, %v737
          %v746 = vld [vmem:[%s5] sm:$0xff]
          %v747 = vld [vmem:[%s5 + $0x8] sm:$0xff]
          %v748 = vld [vmem:[%s5 + $0x10] sm:$0xff]
          %v749 = vld [vmem:[%s5 + $0x18] sm:$0xff]
          %v750 = vld [vmem:[%s5 + $0x20] sm:$0xff]
          %v751 = vld [vmem:[%s5 + $0x28] sm:$0xff]
          %v752 = vld [vmem:[%s5 + $0x30] sm:$0xff]
          %v753 = vld [vmem:[%s5 + $0x38] sm:$0xff]
          %v754 = vmul.f32 %v666, %v738
          %v755 = vmul.f32 %v667, %v739
          %v756 = vmul.f32 %v668, %v740
          %v757 = vmul.f32 %v669, %v741
          %v758 = vmul.f32 %v670, %v742
          %v759 = vmul.f32 %v671, %v743
          %v760 = vmul.f32 %v672, %v744
          %v761 = vmul.f32 %v673, %v745
          %v762 = vsub.f32 %v746, %v754
          %v763 = vsub.f32 %v747, %v755
          %v764 = vsub.f32 %v748, %v756
          %v765 = vsub.f32 %v749, %v757
          %v766 = vsub.f32 %v750, %v758
          %v767 = vsub.f32 %v751, %v759
          %v768 = vsub.f32 %v752, %v760
          %v769 = vsub.f32 %v753, %v761
          %v770 = vld [vmem:[%s0] sm:$0xff]
          %v771 = vld [vmem:[%s0 + $0x8] sm:$0xff]
          %v772 = vld [vmem:[%s0 + $0x10] sm:$0xff]
          %v773 = vld [vmem:[%s0 + $0x18] sm:$0xff]
          %v774 = vld [vmem:[%s0 + $0x20] sm:$0xff]
          %v775 = vld [vmem:[%s0 + $0x28] sm:$0xff]
          %v776 = vld [vmem:[%s0 + $0x30] sm:$0xff]
          %v777 = vld [vmem:[%s0 + $0x38] sm:$0xff]
          %v778 = vld [vmem:[%s0 + $0x40] sm:$0xff]
          %v779 = vld [vmem:[%s0 + $0x48] sm:$0xff]
          %v780 = vld [vmem:[%s0 + $0x50] sm:$0xff]
          %v781 = vld [vmem:[%s0 + $0x58] sm:$0xff]
          %v782 = vld [vmem:[%s0 + $0x60] sm:$0xff]
          %v783 = vld [vmem:[%s0 + $0x68] sm:$0xff]
          %v784 = vld [vmem:[%s0 + $0x70] sm:$0xff]
          %v785 = vld [vmem:[%s0 + $0x78] sm:$0xff]
          %v786 = vld [vmem:[%s1] sm:$0xff]
          %v787 = vld [vmem:[%s1 + $0x8] sm:$0xff]
          %v788 = vld [vmem:[%s1 + $0x10] sm:$0xff]
          %v789 = vld [vmem:[%s1 + $0x18] sm:$0xff]
          %v790 = vld [vmem:[%s1 + $0x20] sm:$0xff]
          %v791 = vld [vmem:[%s1 + $0x28] sm:$0xff]
          %v792 = vld [vmem:[%s1 + $0x30] sm:$0xff]
          %v793 = vld [vmem:[%s1 + $0x38] sm:$0xff]
          %vm794 = vcmask 523264
          %v796 = vsel %vm794, %v786, 0
          %v799 = vsel %vm794, %v787, 0
          %v802 = vsel %vm794, %v788, 0
          %v805 = vsel %vm794, %v789, 0
          %v808 = vsel %vm794, %v790, 0
          %v811 = vsel %vm794, %v791, 0
          %v814 = vsel %vm794, %v792, 0
          %v817 = vsel %vm794, %v793, 0
          %v820 = vsel %vm794, %v770, 0
          %v823 = vsel %vm794, %v771, 0
          %v826 = vsel %vm794, %v772, 0
          %v829 = vsel %vm794, %v773, 0
          %v832 = vsel %vm794, %v774, 0
          %v835 = vsel %vm794, %v775, 0
          %v838 = vsel %vm794, %v776, 0
          %v841 = vsel %vm794, %v777, 0
          %v844 = vsel %vm794, %v778, 0
          %v847 = vsel %vm794, %v779, 0
          %v850 = vsel %vm794, %v780, 0
          %v853 = vsel %vm794, %v781, 0
          %v856 = vsel %vm794, %v782, 0
          %v859 = vsel %vm794, %v783, 0
          %v862 = vsel %vm794, %v784, 0
          %v865 = vsel %vm794, %v785, 0
          %867 = vmatprep.subr.mxu0 0.0
          %868 = vmatpush1.xpose.msra.mxu0 %v865
          %869 = vmatprep.subr.mxu0 0.0
          %870 = vmatpush1.xpose.msra.mxu0 %v862
          %871 = vmatprep.subr.mxu0 0.0
          %872 = vmatpush1.xpose.msra.mxu0 %v859
          %873 = vmatprep.subr.mxu0 0.0
          %874 = vmatpush1.xpose.msra.mxu0 %v856
          %875 = vmatprep.subr.mxu0 0.0
          %876 = vmatpush1.xpose.msra.mxu0 %v853
          %877 = vmatprep.subr.mxu0 0.0
          %878 = vmatpush1.xpose.msra.mxu0 %v850
          %879 = vmatprep.subr.mxu0 0.0
          %880 = vmatpush1.xpose.msra.mxu0 %v847
          %881 = vmatprep.subr.mxu0 0.0
          %882 = vmatpush1.xpose.msra.mxu0 %v844
          %883 = vmatprep.subr.mxu0 0.0
          %884 = vmatpush1.xpose.msra.mxu0 %v841
          %885 = vmatprep.subr.mxu0 0.0
          %886 = vmatpush1.xpose.msra.mxu0 %v838
          %887 = vmatprep.subr.mxu0 0.0
          %888 = vmatpush1.xpose.msra.mxu0 %v835
          %889 = vmatprep.subr.mxu0 0.0
          %890 = vmatpush1.xpose.msra.mxu0 %v832
          %891 = vmatprep.subr.mxu0 0.0
          %892 = vmatpush1.xpose.msra.mxu0 %v829
          %893 = vmatprep.subr.mxu0 0.0
          %894 = vmatpush1.xpose.msra.mxu0 %v826
          %895 = vmatprep.subr.mxu0 0.0
          %896 = vmatpush1.xpose.msra.mxu0 %v823
          %897 = vmatprep.subr.mxu0 0.0
          %898 = vmatpush1.xpose.msra.mxu0 %v820
          %899 = vmatprep.subr.mxu0 0.0
          %900 = vmatpush2.xpose.msra.mxu0 0.0
          %901 = vmatprep.subr.mxu0 0.0
          %902 = vmatpush2.xpose.msra.mxu0 0.0
          %903 = vmatprep.subr.mxu0 0.0
          %904 = vmatpush2.xpose.msra.mxu0 0.0
          %905 = vmatprep.subr.mxu0 0.0
          %906 = vmatpush2.xpose.msra.mxu0 0.0
          %907 = vmatprep.subr.mxu0 0.0
          %908 = vmatpush2.xpose.msra.mxu0 0.0
          %909 = vmatprep.subr.mxu0 0.0
          %910 = vmatpush2.xpose.msra.mxu0 0.0
          %911 = vmatprep.subr.mxu0 0.0
          %912 = vmatpush2.xpose.msra.mxu0 0.0
          %913 = vmatprep.subr.mxu0 0.0
          %914 = vmatpush2.xpose.msra.mxu0 0.0
          %915 = vmatprep.subr.mxu0 0.0
          %916 = vmatpush2.xpose.msra.mxu0 0.0
          %917 = vmatprep.subr.mxu0 0.0
          %918 = vmatpush2.xpose.msra.mxu0 0.0
          %919 = vmatprep.subr.mxu0 0.0
          %920 = vmatpush2.xpose.msra.mxu0 0.0
          %921 = vmatprep.subr.mxu0 0.0
          %922 = vmatpush2.xpose.msra.mxu0 0.0
          %923 = vmatprep.subr.mxu0 0.0
          %924 = vmatpush2.xpose.msra.mxu0 0.0
          %925 = vmatprep.subr.mxu0 0.0
          %926 = vmatpush2.xpose.msra.mxu0 0.0
          %927 = vmatprep.subr.mxu0 0.0
          %928 = vmatpush2.xpose.msra.mxu0 0.0
          %929 = vmatprep.subr.mxu0 0.0
          %930 = vmatpush2.xpose.msra.mxu0 0.0
          %931 = vmatprep.mubr.f32.mxu0 0.0
          %932 = vmatmul.mubr.f32.gmra.mxu0 %v796
          %v933 = vpop.f32.mrf.mxu0
          %v934 = vadd.f32 0.0, %v933
          %v935 = vpop.f32.mrf.mxu0
          %936 = vmatprep.mubr.f32.mxu0 0.0
          %937 = vmatmul.mubr.f32.gmra.mxu0 %v799
          %v938 = vpop.f32.mrf.mxu0
          %v939 = vadd.f32 0.0, %v938
          %v940 = vpop.f32.mrf.mxu0
          %941 = vmatprep.mubr.f32.mxu0 0.0
          %942 = vmatmul.mubr.f32.gmra.mxu0 %v802
          %v943 = vpop.f32.mrf.mxu0
          %v944 = vadd.f32 0.0, %v943
          %v945 = vpop.f32.mrf.mxu0
          %946 = vmatprep.mubr.f32.mxu0 0.0
          %947 = vmatmul.mubr.f32.gmra.mxu0 %v805
          %v948 = vpop.f32.mrf.mxu0
          %v949 = vadd.f32 0.0, %v948
          %v950 = vpop.f32.mrf.mxu0
          %951 = vmatprep.mubr.f32.mxu0 0.0
          %952 = vmatmul.mubr.f32.gmra.mxu0 %v808
          %v953 = vpop.f32.mrf.mxu0
          %v954 = vadd.f32 0.0, %v953
          %v955 = vpop.f32.mrf.mxu0
          %956 = vmatprep.mubr.f32.mxu0 0.0
          %957 = vmatmul.mubr.f32.gmra.mxu0 %v811
          %v958 = vpop.f32.mrf.mxu0
          %v959 = vadd.f32 0.0, %v958
          %v960 = vpop.f32.mrf.mxu0
          %961 = vmatprep.mubr.f32.mxu0 0.0
          %962 = vmatmul.mubr.f32.gmra.mxu0 %v814
          %v963 = vpop.f32.mrf.mxu0
          %v964 = vadd.f32 0.0, %v963
          %v965 = vpop.f32.mrf.mxu0
          %966 = vmatprep.mubr.f32.mxu0 0.0
          %967 = vmatmul.mubr.f32.gmra.mxu0 %v817
          %v968 = vpop.f32.mrf.mxu0
          %v969 = vadd.f32 0.0, %v968
          %v970 = vpop.f32.mrf.mxu0
          %971 = vdwg.mxu0
          %973 = vset.pattern.permute.xlu0 0
          %974 = vperm.xlu0 %973, %v738
          %v975 = vpop.permute.xlu0 %974
          %978 = vset.pattern.permute.xlu0 0
          %979 = vperm.xlu0 %978, %v739
          %v980 = vpop.permute.xlu0 %979
          %983 = vset.pattern.permute.xlu0 0
          %984 = vperm.xlu0 %983, %v740
          %v985 = vpop.permute.xlu0 %984
          %988 = vset.pattern.permute.xlu0 0
          %989 = vperm.xlu0 %988, %v741
          %v990 = vpop.permute.xlu0 %989
          %993 = vset.pattern.permute.xlu0 0
          %994 = vperm.xlu0 %993, %v742
          %v995 = vpop.permute.xlu0 %994
          %998 = vset.pattern.permute.xlu0 0
          %999 = vperm.xlu0 %998, %v743
          %v1000 = vpop.permute.xlu0 %999
          %1003 = vset.pattern.permute.xlu0 0
          %1004 = vperm.xlu0 %1003, %v744
          %v1005 = vpop.permute.xlu0 %1004
          %1008 = vset.pattern.permute.xlu0 0
          %1009 = vperm.xlu0 %1008, %v745
          %v1010 = vpop.permute.xlu0 %1009
          %v1012 = vmul.f32 %v934, %v975
          %v1013 = vmul.f32 %v939, %v980
          %v1014 = vmul.f32 %v944, %v985
          %v1015 = vmul.f32 %v949, %v990
          %v1016 = vmul.f32 %v954, %v995
          %v1017 = vmul.f32 %v959, %v1000
          %v1018 = vmul.f32 %v964, %v1005
          %v1019 = vmul.f32 %v969, %v1010
          %1021 = vset.pattern.permute.xlu0 0
          %1022 = vperm.xlu0 %1021, %v762
          %v1023 = vpop.permute.xlu0 %1022
          %1026 = vset.pattern.permute.xlu0 0
          %1027 = vperm.xlu0 %1026, %v763
          %v1028 = vpop.permute.xlu0 %1027
          %1031 = vset.pattern.permute.xlu0 0
          %1032 = vperm.xlu0 %1031, %v764
          %v1033 = vpop.permute.xlu0 %1032
          %1036 = vset.pattern.permute.xlu0 0
          %1037 = vperm.xlu0 %1036, %v765
          %v1038 = vpop.permute.xlu0 %1037
          %1041 = vset.pattern.permute.xlu0 0
          %1042 = vperm.xlu0 %1041, %v766
          %v1043 = vpop.permute.xlu0 %1042
          %1046 = vset.pattern.permute.xlu0 0
          %1047 = vperm.xlu0 %1046, %v767
          %v1048 = vpop.permute.xlu0 %1047
          %1051 = vset.pattern.permute.xlu0 0
          %1052 = vperm.xlu0 %1051, %v768
          %v1053 = vpop.permute.xlu0 %1052
          %1056 = vset.pattern.permute.xlu0 0
          %1057 = vperm.xlu0 %1056, %v769
          %v1058 = vpop.permute.xlu0 %1057
          %v1060 = vadd.f32 %v1012, %v1023
          %v1061 = vadd.f32 %v1013, %v1028
          %v1062 = vadd.f32 %v1014, %v1033
          %v1063 = vadd.f32 %v1015, %v1038
          %v1064 = vadd.f32 %v1016, %v1043
          %v1065 = vadd.f32 %v1017, %v1048
          %v1066 = vadd.f32 %v1018, %v1053
          %v1067 = vadd.f32 %v1019, %v1058
          %v1068 = vmax.f32 %v1060, 0.0
          %v1069 = vmax.f32 %v1061, 0.0
          %v1070 = vmax.f32 %v1062, 0.0
          %v1071 = vmax.f32 %v1063, 0.0
          %v1072 = vmax.f32 %v1064, 0.0
          %v1073 = vmax.f32 %v1065, 0.0
          %v1074 = vmax.f32 %v1066, 0.0
          %v1075 = vmax.f32 %v1067, 0.0
          %v1076 = vld [vmem:[%s2] sm:$0xff]
          %v1077 = vld [vmem:[%s2 + $0x8] sm:$0xff]
          %v1078 = vld [vmem:[%s2 + $0x10] sm:$0xff]
          %v1079 = vld [vmem:[%s2 + $0x18] sm:$0xff]
          %v1081 = vsel %vm794, %v1076, 0
          %v1084 = vsel %vm794, %v1077, 0
          %v1087 = vsel %vm794, %v1078, 0
          %v1090 = vsel %vm794, %v1079, 0
          %1092 = vmatprep.subr.mxu0 0.0
          %1093 = vmatpush1.msra.mxu0 0.0
          %1094 = vmatprep.subr.mxu0 0.0
          %1095 = vmatpush1.msra.mxu0 0.0
          %1096 = vmatprep.subr.mxu0 0.0
          %1097 = vmatpush1.msra.mxu0 0.0
          %1098 = vmatprep.subr.mxu0 0.0
          %1099 = vmatpush1.msra.mxu0 0.0
          %1100 = vmatprep.subr.mxu0 0.0
          %1101 = vmatpush1.msra.mxu0 0.0
          %1102 = vmatprep.subr.mxu0 0.0
          %1103 = vmatpush1.msra.mxu0 0.0
          %1104 = vmatprep.subr.mxu0 0.0
          %1105 = vmatpush1.msra.mxu0 0.0
          %1106 = vmatprep.subr.mxu0 0.0
          %1107 = vmatpush1.msra.mxu0 0.0
          %1108 = vmatprep.subr.mxu0 0.0
          %1109 = vmatpush1.msra.mxu0 %v1075
          %1110 = vmatprep.subr.mxu0 0.0
          %1111 = vmatpush1.msra.mxu0 %v1074
          %1112 = vmatprep.subr.mxu0 0.0
          %1113 = vmatpush1.msra.mxu0 %v1073
          %1114 = vmatprep.subr.mxu0 0.0
          %1115 = vmatpush1.msra.mxu0 %v1072
          %1116 = vmatprep.subr.mxu0 0.0
          %1117 = vmatpush1.msra.mxu0 %v1071
          %1118 = vmatprep.subr.mxu0 0.0
          %1119 = vmatpush1.msra.mxu0 %v1070
          %1120 = vmatprep.subr.mxu0 0.0
          %1121 = vmatpush1.msra.mxu0 %v1069
          %1122 = vmatprep.subr.mxu0 0.0
          %1123 = vmatpush1.msra.mxu0 %v1068
          %1124 = vmatprep.subr.mxu0 0.0
          %1125 = vmatpush2.msra.mxu0 0.0
          %1126 = vmatprep.subr.mxu0 0.0
          %1127 = vmatpush2.msra.mxu0 0.0
          %1128 = vmatprep.subr.mxu0 0.0
          %1129 = vmatpush2.msra.mxu0 0.0
          %1130 = vmatprep.subr.mxu0 0.0
          %1131 = vmatpush2.msra.mxu0 0.0
          %1132 = vmatprep.subr.mxu0 0.0
          %1133 = vmatpush2.msra.mxu0 0.0
          %1134 = vmatprep.subr.mxu0 0.0
          %1135 = vmatpush2.msra.mxu0 0.0
          %1136 = vmatprep.subr.mxu0 0.0
          %1137 = vmatpush2.msra.mxu0 0.0
          %1138 = vmatprep.subr.mxu0 0.0
          %1139 = vmatpush2.msra.mxu0 0.0
          %1140 = vmatprep.subr.mxu0 0.0
          %1141 = vmatpush2.msra.mxu0 0.0
          %1142 = vmatprep.subr.mxu0 0.0
          %1143 = vmatpush2.msra.mxu0 0.0
          %1144 = vmatprep.subr.mxu0 0.0
          %1145 = vmatpush2.msra.mxu0 0.0
          %1146 = vmatprep.subr.mxu0 0.0
          %1147 = vmatpush2.msra.mxu0 0.0
          %1148 = vmatprep.subr.mxu0 0.0
          %1149 = vmatpush2.msra.mxu0 0.0
          %1150 = vmatprep.subr.mxu0 0.0
          %1151 = vmatpush2.msra.mxu0 0.0
          %1152 = vmatprep.subr.mxu0 0.0
          %1153 = vmatpush2.msra.mxu0 0.0
          %1154 = vmatprep.subr.mxu0 0.0
          %1155 = vmatpush2.msra.mxu0 0.0
          %1156 = vmatprep.mubr.f32.mxu0 0.0
          %1157 = vmatmul.mubr.f32.gmra.mxu0 %v1081
          %v1158 = vpop.f32.mrf.mxu0
          %v1159 = vadd.f32 0.0, %v1158
          %v1160 = vpop.f32.mrf.mxu0
          %1161 = vmatprep.mubr.f32.mxu0 0.0
          %1162 = vmatmul.mubr.f32.gmra.mxu0 %v1084
          %v1163 = vpop.f32.mrf.mxu0
          %v1164 = vadd.f32 0.0, %v1163
          %v1165 = vpop.f32.mrf.mxu0
          %1166 = vmatprep.mubr.f32.mxu0 0.0
          %1167 = vmatmul.mubr.f32.gmra.mxu0 %v1087
          %v1168 = vpop.f32.mrf.mxu0
          %v1169 = vadd.f32 0.0, %v1168
          %v1170 = vpop.f32.mrf.mxu0
          %1171 = vmatprep.mubr.f32.mxu0 0.0
          %1172 = vmatmul.mubr.f32.gmra.mxu0 %v1090
          %v1173 = vpop.f32.mrf.mxu0
          %v1174 = vadd.f32 0.0, %v1173
          %v1175 = vpop.f32.mrf.mxu0
          %1176 = vdwg.mxu0
          %v1177 = vsel %vm349, 1, 0
          %vm1178 = vcmp.eq.s32.totalorder %v1177, 1
          %v1179 = vsel %vm1178, %v1159, 0.0
          %v1180 = vsel %vm1178, %v1164, 0.0
          %v1181 = vsel %vm1178, %v1169, 0.0
          %v1182 = vsel %vm1178, %v1174, 0.0
          %v1183 = vld [vmem:[#allocation4] sm:$0xff]
          %v1184 = vld [vmem:[#allocation4 + $0x8] sm:$0xff]
          %v1185 = vld [vmem:[#allocation4 + $0x10] sm:$0xff]
          %v1186 = vld [vmem:[#allocation4 + $0x18] sm:$0xff]
          %1187 = vadd.xlane.f32.xlu0 %v1179
          %v1188 = vpop.xlane.xlu0 %1187
          %1189 = vadd.xlane.f32.xlu0 %v1180
          %v1190 = vpop.xlane.xlu0 %1189
          %1191 = vadd.xlane.f32.xlu0 %v1181
          %v1192 = vpop.xlane.xlu0 %1191
          %1193 = vadd.xlane.f32.xlu0 %v1182
          %v1194 = vpop.xlane.xlu0 %1193
          %v1195 = vadd.f32 %v1183, %v1188
          %v1196 = vadd.f32 %v1184, %v1190
          %v1197 = vadd.f32 %v1185, %v1192
          %v1198 = vadd.f32 %v1186, %v1194
          %vm1199 = vcmask 7168
          %1200 = vst.msk [vmem:[#allocation4] sm:$0xff] %vm1199, %v1195
          %1201 = vst.msk [vmem:[#allocation4 + $0x8] sm:$0xff] %vm1199, %v1196
          %1202 = vst.msk [vmem:[#allocation4 + $0x10] sm:$0xff] %vm1199, %v1197
          %1203 = vst.msk [vmem:[#allocation4 + $0x18] sm:$0xff] %vm1199, %v1198
          %v1204 = vld [vmem:[#allocation5] sm:$0xff]
          %v1205 = vld [vmem:[#allocation5 + $0x8] sm:$0xff]
          %v1206 = vld [vmem:[#allocation5 + $0x10] sm:$0xff]
          %v1207 = vld [vmem:[#allocation5 + $0x18] sm:$0xff]
          %v1208 = vmul.f32 %v1179, %v1179
          %v1209 = vmul.f32 %v1180, %v1180
          %v1210 = vmul.f32 %v1181, %v1181
          %v1211 = vmul.f32 %v1182, %v1182
          %1212 = vadd.xlane.f32.xlu0 %v1208
          %v1213 = vpop.xlane.xlu0 %1212
          %1214 = vadd.xlane.f32.xlu0 %v1209
          %v1215 = vpop.xlane.xlu0 %1214
          %1216 = vadd.xlane.f32.xlu0 %v1210
          %v1217 = vpop.xlane.xlu0 %1216
          %1218 = vadd.xlane.f32.xlu0 %v1211
          %v1219 = vpop.xlane.xlu0 %1218
          %v1220 = vadd.f32 %v1204, %v1213
          %v1221 = vadd.f32 %v1205, %v1215
          %v1222 = vadd.f32 %v1206, %v1217
          %v1223 = vadd.f32 %v1207, %v1219
          %1224 = vst.msk [vmem:[#allocation5] sm:$0xff] %vm1199, %v1220
          %1225 = vst.msk [vmem:[#allocation5 + $0x8] sm:$0xff] %vm1199, %v1221
          %1226 = vst.msk [vmem:[#allocation5 + $0x10] sm:$0xff] %vm1199, %v1222
          %1227 = vst.msk [vmem:[#allocation5 + $0x18] sm:$0xff] %vm1199, %v1223
          %s1228 = sshra.s32 %s344, 7
          %s1229 = sand.u32 %s344, 127
          %s1230 = scalar_lea.vmem [#allocation6], %s1228
          %1231 = vst [vmem:[%s1230] sm:$0xff] %v1179
          %1232 = vst [vmem:[%s1230 + $0x8] sm:$0xff] %v1180
          %1233 = vst [vmem:[%s1230 + $0x10] sm:$0xff] %v1181
          %1234 = vst [vmem:[%s1230 + $0x18] sm:$0xff] %v1182
        $region68: #{tpu_custom_call.1} parent=55 // pred_fallthru
          _
        %p1235 = scmp.eq.s32.totalorder %s27, 2
        // Predicated region
        $region69: #{tpu_custom_call.1} parent=55 // pred_check
          %p1236 = pneg %p1235
        $region70: #{tpu_custom_call.1} parent=55 // pred_check_branch
          %1238 = sbr.rel (%p1236) target = $region72
        $region71: #{tpu_custom_call.1} parent=55 // pred_region
          %s1239 = sshra.s32 %s344, 7
          %s1240 = sand.u32 %s344, 127
          %s1241 = scalar_lea.vmem [#allocation6], %s1239
          %v1242 = vld [vmem:[%s1241] sm:$0xff]
          %v1243 = vld [vmem:[%s1241 + $0x8] sm:$0xff]
          %v1244 = vld [vmem:[%s1241 + $0x10] sm:$0xff]
          %v1245 = vld [vmem:[%s1241 + $0x18] sm:$0xff]
          %v1246 = vld [vmem:[#allocation4] sm:$0xff]
          %v1247 = vld [vmem:[#allocation4 + $0x8] sm:$0xff]
          %v1248 = vld [vmem:[#allocation4 + $0x10] sm:$0xff]
          %v1249 = vld [vmem:[#allocation4 + $0x18] sm:$0xff]
          %v1250 = vmul.f32 %v1246, 0.015625
          %v1251 = vmul.f32 %v1247, 0.015625
          %v1252 = vmul.f32 %v1248, 0.015625
          %v1253 = vmul.f32 %v1249, 0.015625
          %v1254 = vld [vmem:[#allocation5] sm:$0xff]
          %v1255 = vld [vmem:[#allocation5 + $0x8] sm:$0xff]
          %v1256 = vld [vmem:[#allocation5 + $0x10] sm:$0xff]
          %v1257 = vld [vmem:[#allocation5 + $0x18] sm:$0xff]
          %v1258 = vmul.f32 %v1254, 0.015625
          %v1259 = vmul.f32 %v1255, 0.015625
          %v1260 = vmul.f32 %v1256, 0.015625
          %v1261 = vmul.f32 %v1257, 0.015625
          %v1262 = vmul.f32 %v1250, %v1250
          %v1263 = vmul.f32 %v1251, %v1251
          %v1264 = vmul.f32 %v1252, %v1252
          %v1265 = vmul.f32 %v1253, %v1253
          %v1266 = vsub.f32 %v1258, %v1262
          %v1267 = vsub.f32 %v1259, %v1263
          %v1268 = vsub.f32 %v1260, %v1264
          %v1269 = vsub.f32 %v1261, %v1265
          %v1270 = vmax.f32 %v1266, 0.0
          %v1271 = vmax.f32 %v1267, 0.0
          %v1272 = vmax.f32 %v1268, 0.0
          %v1273 = vmax.f32 %v1269, 0.0
          %v1274 = vld [vmem:[%s6] sm:$0xff]
          %v1275 = vld [vmem:[%s6 + $0x8] sm:$0xff]
          %v1276 = vld [vmem:[%s6 + $0x10] sm:$0xff]
          %v1277 = vld [vmem:[%s6 + $0x18] sm:$0xff]
          %v1278 = vadd.f32 %v1270, 1e-05
          %v1279 = vadd.f32 %v1271, 1e-05
          %v1280 = vadd.f32 %v1272, 1e-05
          %v1281 = vadd.f32 %v1273, 1e-05
          %v1282 = vrsqrt.pop %v1278
          %v1283 = vrsqrt.pop %v1279
          %v1284 = vrsqrt.pop %v1280
          %v1285 = vrsqrt.pop %v1281
          %v1286 = vmul.f32 %v1274, %v1282
          %v1287 = vmul.f32 %v1275, %v1283
          %v1288 = vmul.f32 %v1276, %v1284
          %v1289 = vmul.f32 %v1277, %v1285
          %v1290 = vld [vmem:[%s7] sm:$0xff]
          %v1291 = vld [vmem:[%s7 + $0x8] sm:$0xff]
          %v1292 = vld [vmem:[%s7 + $0x10] sm:$0xff]
          %v1293 = vld [vmem:[%s7 + $0x18] sm:$0xff]
          %v1294 = vmul.f32 %v1250, %v1286
          %v1295 = vmul.f32 %v1251, %v1287
          %v1296 = vmul.f32 %v1252, %v1288
          %v1297 = vmul.f32 %v1253, %v1289
          %v1298 = vsub.f32 %v1290, %v1294
          %v1299 = vsub.f32 %v1291, %v1295
          %v1300 = vsub.f32 %v1292, %v1296
          %v1301 = vsub.f32 %v1293, %v1297
          %1303 = vset.pattern.permute.xlu0 0
          %1304 = vperm.xlu0 %1303, %v1286
          %v1305 = vpop.permute.xlu0 %1304
          %1308 = vset.pattern.permute.xlu0 0
          %1309 = vperm.xlu0 %1308, %v1287
          %v1310 = vpop.permute.xlu0 %1309
          %1313 = vset.pattern.permute.xlu0 0
          %1314 = vperm.xlu0 %1313, %v1288
          %v1315 = vpop.permute.xlu0 %1314
          %1318 = vset.pattern.permute.xlu0 0
          %1319 = vperm.xlu0 %1318, %v1289
          %v1320 = vpop.permute.xlu0 %1319
          %v1322 = vmul.f32 %v1242, %v1305
          %v1323 = vmul.f32 %v1243, %v1310
          %v1324 = vmul.f32 %v1244, %v1315
          %v1325 = vmul.f32 %v1245, %v1320
          %1327 = vset.pattern.permute.xlu0 0
          %1328 = vperm.xlu0 %1327, %v1298
          %v1329 = vpop.permute.xlu0 %1328
          %1332 = vset.pattern.permute.xlu0 0
          %1333 = vperm.xlu0 %1332, %v1299
          %v1334 = vpop.permute.xlu0 %1333
          %1337 = vset.pattern.permute.xlu0 0
          %1338 = vperm.xlu0 %1337, %v1300
          %v1339 = vpop.permute.xlu0 %1338
          %1342 = vset.pattern.permute.xlu0 0
          %1343 = vperm.xlu0 %1342, %v1301
          %v1344 = vpop.permute.xlu0 %1343
          %v1346 = vadd.f32 %v1322, %v1329
          %v1347 = vadd.f32 %v1323, %v1334
          %v1348 = vadd.f32 %v1324, %v1339
          %v1349 = vadd.f32 %v1325, %v1344
          %v1350 = vmax.f32 %v1346, 0.0
          %v1351 = vmax.f32 %v1347, 0.0
          %v1352 = vmax.f32 %v1348, 0.0
          %v1353 = vmax.f32 %v1349, 0.0
          %v1354 = vld [vmem:[%s3] sm:$0x1]
          %v1355 = vld [vmem:[#allocation7] sm:$0x1]
          %1357 = vset.pattern.permute.xlu0 0
          %1358 = vperm.xlu0 %1357, %v1355
          %v1359 = vpop.permute.xlu0 %1358
          %v1361 = vlaneseq
          %v1362 = vshrl.u32 %v1361, 7
          %v1363 = vsub.s32 0, %v1362
          %v1364 = vrot.slane %v1359, %v1363
          %vm1365 = vcmask 261120
          %v1367 = vsel %vm1365, %v1354, 0
          %1369 = vmatprep.subr.mxu0 0.0
          %1370 = vmatpush1.msra.mxu0 0.0
          %1371 = vmatprep.subr.mxu0 0.0
          %1372 = vmatpush1.msra.mxu0 0.0
          %1373 = vmatprep.subr.mxu0 0.0
          %1374 = vmatpush1.msra.mxu0 0.0
          %1375 = vmatprep.subr.mxu0 0.0
          %1376 = vmatpush1.msra.mxu0 0.0
          %1377 = vmatprep.subr.mxu0 0.0
          %1378 = vmatpush1.msra.mxu0 0.0
          %1379 = vmatprep.subr.mxu0 0.0
          %1380 = vmatpush1.msra.mxu0 0.0
          %1381 = vmatprep.subr.mxu0 0.0
          %1382 = vmatpush1.msra.mxu0 0.0
          %1383 = vmatprep.subr.mxu0 0.0
          %1384 = vmatpush1.msra.mxu0 0.0
          %1385 = vmatprep.subr.mxu0 0.0
          %1386 = vmatpush1.msra.mxu0 0.0
          %1387 = vmatprep.subr.mxu0 0.0
          %1388 = vmatpush1.msra.mxu0 0.0
          %1389 = vmatprep.subr.mxu0 0.0
          %1390 = vmatpush1.msra.mxu0 0.0
          %1391 = vmatprep.subr.mxu0 0.0
          %1392 = vmatpush1.msra.mxu0 0.0
          %1393 = vmatprep.subr.mxu0 0.0
          %1394 = vmatpush1.msra.mxu0 %v1353
          %1395 = vmatprep.subr.mxu0 0.0
          %1396 = vmatpush1.msra.mxu0 %v1352
          %1397 = vmatprep.subr.mxu0 0.0
          %1398 = vmatpush1.msra.mxu0 %v1351
          %1399 = vmatprep.subr.mxu0 0.0
          %1400 = vmatpush1.msra.mxu0 %v1350
          %1401 = vmatprep.subr.mxu0 0.0
          %1402 = vmatpush2.msra.mxu0 0.0
          %1403 = vmatprep.subr.mxu0 0.0
          %1404 = vmatpush2.msra.mxu0 0.0
          %1405 = vmatprep.subr.mxu0 0.0
          %1406 = vmatpush2.msra.mxu0 0.0
          %1407 = vmatprep.subr.mxu0 0.0
          %1408 = vmatpush2.msra.mxu0 0.0
          %1409 = vmatprep.subr.mxu0 0.0
          %1410 = vmatpush2.msra.mxu0 0.0
          %1411 = vmatprep.subr.mxu0 0.0
          %1412 = vmatpush2.msra.mxu0 0.0
          %1413 = vmatprep.subr.mxu0 0.0
          %1414 = vmatpush2.msra.mxu0 0.0
          %1415 = vmatprep.subr.mxu0 0.0
          %1416 = vmatpush2.msra.mxu0 0.0
          %1417 = vmatprep.subr.mxu0 0.0
          %1418 = vmatpush2.msra.mxu0 0.0
          %1419 = vmatprep.subr.mxu0 0.0
          %1420 = vmatpush2.msra.mxu0 0.0
          %1421 = vmatprep.subr.mxu0 0.0
          %1422 = vmatpush2.msra.mxu0 0.0
          %1423 = vmatprep.subr.mxu0 0.0
          %1424 = vmatpush2.msra.mxu0 0.0
          %1425 = vmatprep.subr.mxu0 0.0
          %1426 = vmatpush2.msra.mxu0 0.0
          %1427 = vmatprep.subr.mxu0 0.0
          %1428 = vmatpush2.msra.mxu0 0.0
          %1429 = vmatprep.subr.mxu0 0.0
          %1430 = vmatpush2.msra.mxu0 0.0
          %1431 = vmatprep.subr.mxu0 0.0
          %1432 = vmatpush2.msra.mxu0 0.0
          %1433 = vmatprep.mubr.f32.mxu0 0.0
          %1434 = vmatmul.mubr.f32.gmra.mxu0 %v1367
          %v1435 = vpop.f32.mrf.mxu0
          %v1436 = vadd.f32 %v1364, %v1435
          %v1437 = vpop.f32.mrf.mxu0
          %1438 = vdwg.mxu0
          %1439 = vst [vmem:[#allocation8] sm:$0x1] %v1436
        $region72: #{tpu_custom_call.1} parent=55 // pred_fallthru
          _
        // Predicated region
        $region73: #{tpu_custom_call.1} parent=55 // pred_check
          %p1440 = pneg %p237
        $region74: #{tpu_custom_call.1} parent=55 // pred_check_branch
          %1442 = sbr.rel (%p1440) target = $region76
        $region75: #{tpu_custom_call.1} parent=55 // pred_region
          %s1444 = ssub.s32 16, 16
          %1445 = vsyncadd [#allocation9], %s1444
          %s1447 = sshll.u32 [#allocation8], 4
          %s1448 = int_to_ptr.vmem [resolvable:$true] %s1447
          %1450 = dma.vmem_to_hbm [thread:$0]  %s1448, 16, %s9, [#allocation9]
        $region76: #{tpu_custom_call.1} parent=55 // pred_fallthru
          _
        // Predicated region
        $region77: #{tpu_custom_call.1} parent=55 // pred_check
          %p1451 = pneg %p237
        $region78: #{tpu_custom_call.1} parent=55 // pred_check_branch
          %1453 = sbr.rel (%p1451) target = $region80
        $region79: #{tpu_custom_call.1} parent=55 // pred_region
          %1454 = dma.done [#allocation9], 16
        $region80: #{tpu_custom_call.1} parent=55 // pred_fallthru
          _
      $region56: #{tpu_custom_call.1} parent=5 // pred_fallthru
        _
      %p1455 = scmp.le.s32.totalorder 2, %s18
      // Predicated region
      $region81: #{tpu_custom_call.1} parent=5 // pred_check
        %p1456 = pneg %p1455
      $region82: #{tpu_custom_call.1} parent=5 // pred_check_branch
        %1458 = sbr.rel (%p1456) target = $region84
      $region83: #{tpu_custom_call.1} parent=5 // pred_region
        %s1459 = ssub.s32 %s18, 2
      $region84: #{tpu_custom_call.1} parent=5 // pred_fallthru
        _
    $region6: #{tpu_custom_call.1} parent=1 // loop_footer
      %s22 = sadd.s32 1, %s18
    $region7: #{tpu_custom_call.1} parent=1 // loop_footer_branch
      %17 = sbr.rel target = $region3
    $region8: #{tpu_custom_call.1} parent=1 // loop_exit
      _
    %1460 = vsyncpa [#allocation9], 1
    %s1461 = scalar_lea.sflag [#allocation9], 1
    %1462 = vsyncpa %s1461, 1

</llo_original>
